<compile_context>
chip_gen: v5e
topology: v5e:2x2
jax: 0.10.0
libtpu: 0.0.40
codegen_flags: <defaults>
</compile_context>

<pallas_src>
import jax
import jax.numpy as jnp
from jax import lax
from jax.experimental import pallas as pl
from jax.experimental.pallas import tpu as pltpu


def _rup(n, m):
    return ((n + m - 1) // m) * m


def _pad_to(a, shape):
    return jnp.pad(a, [(0, s - d) for d, s in zip(a.shape, shape)])


# ---------------------------------------------------------------------------
# Kernel
# ---------------------------------------------------------------------------
def _make_fused_kernel(T, TB, Ep, Hp, Op, unroll):
    """Fused (layer0 -> layer1 -> fused heads) kernel for one batch tile.

    Refs:
      x_ref   : (T, TB, Ep)   time-major input slab for this batch tile
      wih0    : (Ep, Hp)      layer-0 input weight (transposed, padded)
      whh0    : (Hp, Hp)      layer-0 recurrent weight
      b0      : (1, Hp)       layer-0 bias (b_ih + b_hh)
      w1      : (2*Hp, Hp)    stacked [wih1; whh1]  (K=256 fused dot)
      b1      : (1, Hp)
      wh      : (Hp+Op, Op)   stacked [wihh; whhh]  (K=256 fused dot)
      bh      : (1, Op)
      y_ref   : (T, TB, Op)   time-major fused head outputs
      xp_ref  : (T, TB, Hp)   VMEM scratch for the batched layer-0 projection
    """

    def kernel(x_ref, wih0_ref, whh0_ref, b0_ref, w1_ref, b1_ref,
               wh_ref, bh_ref, y_ref, xp_ref):
        # Hoist loop-invariant weights / biases out of the recurrence.
        whh0 = whh0_ref[...]
        w1 = w1_ref[...]
        b1 = b1_ref[...]
        wh = wh_ref[...]
        bh = bh_ref[...]

        # Batched layer-0 input projection for all timesteps at once
        # (one big MXU matmul, M = T*TB), written to dedicated scratch.
        xp = (jnp.dot(x_ref[...].reshape(T * TB, Ep), wih0_ref[...],
                      preferred_element_type=jnp.float32) + b0_ref[...])
        xp_ref[...] = xp.reshape(T, TB, Hp)

        def step(t, carry):
            h0, h1, o = carry
            # Backbone layer 0: input projection precomputed in scratch.
            h0 = jnp.tanh(
                xp_ref[t]
                + jnp.dot(h0, whh0, preferred_element_type=jnp.float32))
            # Backbone layer 1 (dropout between layers is a no-op here).
            # Single K=2*Hp dot on [h0 | h1] against stacked [wih1; whh1].
            h1 = jnp.tanh(
                jnp.dot(jnp.concatenate([h0, h1], axis=1), w1,
                        preferred_element_type=jnp.float32) + b1)
            # Fused heads: single K=Hp+Op dot on [h1 | o] against [wihh; whhh]
            # (block-diagonal whhh keeps the three heads independent).
            o = jnp.tanh(
                jnp.dot(jnp.concatenate([h1, o], axis=1), wh,
                        preferred_element_type=jnp.float32) + bh)
            y_ref[t] = o
            return (h0, h1, o)

        carry = (jnp.zeros((TB, Hp), jnp.float32),
                 jnp.zeros((TB, Hp), jnp.float32),
                 jnp.zeros((TB, Op), jnp.float32))
        # Partially unrolled: bounded live ranges, scheduler visibility.
        # Final carry (last hidden states) is intentionally discarded: the
        # module's forward() only returns the head sequences.
        lax.fori_loop(0, T, step, carry, unroll=unroll)

    return kernel


# ---------------------------------------------------------------------------
# One-time weight preprocessing (hoisted out of the per-call path)
# ---------------------------------------------------------------------------
def prepare_kernel_params(params):
    """Transpose / pad / fuse / stack all RNN weights once, outside forward."""
    p0, p1 = params["rnn_l0"], params["rnn_l1"]
    H, E = p0["w_ih"].shape
    heads = [params["head_init"], params["head_final"], params["head_cap"]]
    head_sizes = tuple(int(p["w_ih"].shape[0]) for p in heads)
    O = sum(head_sizes)

    Ep, Hp, Op = _rup(E, 128), _rup(H, 128), _rup(O, 128)
    f32 = jnp.float32

    wih0 = _pad_to(p0["w_ih"].T.astype(f32), (Ep, Hp))
    whh0 = _pad_to(p0["w_hh"].T.astype(f32), (Hp, Hp))
    b0 = _pad_to((p0["b_ih"] + p0["b_hh"])[None, :].astype(f32), (1, Hp))

    wih1 = _pad_to(p1["w_ih"].T.astype(f32), (Hp, Hp))
    whh1 = _pad_to(p1["w_hh"].T.astype(f32), (Hp, Hp))
    w1 = jnp.concatenate([wih1, whh1], axis=0)            # (2*Hp, Hp)
    b1 = _pad_to((p1["b_ih"] + p1["b_hh"])[None, :].astype(f32), (1, Hp))

    # Fuse the three heads: concatenated input weights, block-diag recurrence.
    wihh = jnp.zeros((Hp, Op), f32)
    whhh = jnp.zeros((Op, Op), f32)
    bh = jnp.zeros((1, Op), f32)
    off = 0
    for p, s in zip(heads, head_sizes):
        wihh = wihh.at[:H, off:off + s].set(p["w_ih"].T.astype(f32))
        whhh = whhh.at[off:off + s, off:off + s].set(p["w_hh"].T.astype(f32))
        bh = bh.at[0, off:off + s].set((p["b_ih"] + p["b_hh"]).astype(f32))
        off += s
    wh = jnp.concatenate([wihh, whhh], axis=0)             # (Hp+Op, Op)

    kp = dict(wih0=wih0, whh0=whh0, b0=b0, w1=w1, b1=b1, wh=wh, bh=bh)
    return kp, head_sizes


# ---------------------------------------------------------------------------
# Wrapper: layout, tiling, pallas_call
# ---------------------------------------------------------------------------
def rnn_clasica_fused(x_emb, kp):
    """x_emb: (B, T, E) f32 embeddings -> (B, T, Op) fused head sequences."""
    B, T, E = x_emb.shape
    Ep, Hp = kp["wih0"].shape
    Op = kp["wh"].shape[1]

    # Batch tile: multiple of 8 sublanes, up to 128 rows per grid step.
    TB = min(128, _rup(B, 8))
    Bp = _rup(B, TB)

    # Time-major layout so every per-step slice is a dense (TB, lanes) tile.
    # (One-time transpose in the wrapper; pads are no-ops when already aligned.)
    x = jnp.transpose(x_emb.astype(jnp.float32), (1, 0, 2))     # (T, B, E)
    x = jnp.pad(x, ((0, 0), (0, Bp - B), (0, Ep - E)))           # (T, Bp, Ep)

    unroll = max(1, min(8, T))
    kernel = _make_fused_kernel(T, TB, Ep, Hp, Op, unroll)

    # VMEM budget: all operands are double-buffered by Pallas (weights too,
    # their index maps are constant) + the single-buffered xproj scratch.
    # Capped with headroom under v7x's 64 MiB per-TC VMEM.
    bytes_w = 4 * (Ep * Hp + Hp * Hp + 2 * Hp * Hp + (Hp + Op) * Op
                   + 2 * Hp + Op)
    bytes_stream = 4 * T * TB * (Ep + Op)
    bytes_scratch = 4 * T * TB * Hp
    need = 2 * (bytes_w + bytes_stream) + bytes_scratch
    vmem_limit = int(min(60 * 1024 * 1024,
                         max(4 * 1024 * 1024, 2 * need)))

    def const_spec(shape):
        return pl.BlockSpec(shape, lambda b: (0,) * len(shape))

    y = pl.pallas_call(
        kernel,
        out_shape=jax.ShapeDtypeStruct((T, Bp, Op), jnp.float32),
        grid=(Bp // TB,),
        in_specs=[
            pl.BlockSpec((T, TB, Ep), lambda b: (0, b, 0)),   # x, per batch tile
            const_spec((Ep, Hp)),          # wih0
            const_spec((Hp, Hp)),          # whh0
            const_spec((1, Hp)),           # b0
            const_spec((2 * Hp, Hp)),      # stacked [wih1; whh1]
            const_spec((1, Hp)),           # b1
            const_spec((Hp + Op, Op)),     # stacked [wihh; whhh]
            const_spec((1, Op)),           # bh
        ],
        out_specs=pl.BlockSpec((T, TB, Op), lambda b: (0, b, 0)),
        scratch_shapes=[pltpu.VMEM((T, TB, Hp), jnp.float32)],
        compiler_params=pltpu.CompilerParams(
            dimension_semantics=("parallel",),   # batch tiles across TCs
            vmem_limit_bytes=vmem_limit),
    )(x, kp["wih0"], kp["whh0"], kp["b0"], kp["w1"], kp["b1"],
      kp["wh"], kp["bh"])

    # Back to batch-major, drop batch padding.
    return jnp.transpose(y[:, :B, :], (1, 0, 2))                 # (B, T, Op)


# ---------------------------------------------------------------------------
# Parameter init (PyTorch-style) and forward
# ---------------------------------------------------------------------------
def init_rnn_params(key, input_size, hidden_size):
    k = 1.0 / jnp.sqrt(jnp.float32(hidden_size))
    ks = jax.random.split(key, 4)
    return dict(
        w_ih=jax.random.uniform(ks[0], (hidden_size, input_size), jnp.float32, -k, k),
        w_hh=jax.random.uniform(ks[1], (hidden_size, hidden_size), jnp.float32, -k, k),
        b_ih=jax.random.uniform(ks[2], (hidden_size,), jnp.float32, -k, k),
        b_hh=jax.random.uniform(ks[3], (hidden_size,), jnp.float32, -k, k),
    )


def init_params(key, vocab_size, embedding_dim, hidden_size,
                initial_punct_classes=2, final_punct_classes=4, cap_punct_classes=4):
    ks = jax.random.split(key, 6)
    # TODO(synk): pretrained BERT word-embedding table replaced by a random table.
    return dict(
        embedding=jax.random.normal(ks[0], (vocab_size, embedding_dim), jnp.float32) * 0.02,
        rnn_l0=init_rnn_params(ks[1], embedding_dim, hidden_size),
        rnn_l1=init_rnn_params(ks[2], hidden_size, hidden_size),
        head_init=init_rnn_params(ks[3], hidden_size, initial_punct_classes),
        head_final=init_rnn_params(ks[4], hidden_size, final_punct_classes),
        head_cap=init_rnn_params(ks[5], hidden_size, cap_punct_classes),
    )


def make_forward(head_sizes):
    s0, s1, s2 = head_sizes

    @jax.jit
    def forward(embedding, kp, tokens):
        # TODO(synk): embedding gather could be fused into the kernel via
        # scalar-prefetched token ids + pl.Element row gather; kept as plain
        # JAX glue here.
        x = embedding[tokens].astype(jnp.float32)      # (B, T, E)
        y = rnn_clasica_fused(x, kp)                   # (B, T, Op)
        x_initial_punct = y[:, :, :s0]                 # (B, T, 2)
        x_final_punct = y[:, :, s0:s0 + s1]            # (B, T, 4)
        x_cap = y[:, :, s0 + s1:s0 + s1 + s2]          # (B, T, 4)
        # NOTE: the module defines nn.Softmax(dim=1) but never applies it in
        # forward(); matching that behavior.
        return x_initial_punct, x_final_punct, x_cap

    return forward


if __name__ == "__main__":
    B, T = 2, 8
    vocab_size, embedding_dim, hidden_size = 100, 128, 32

    key = jax.random.PRNGKey(0)
    k_tok, k_par = jax.random.split(key)
    tokens = jax.random.randint(k_tok, (B, T), 0, vocab_size, dtype=jnp.int32)
    params = init_params(k_par, vocab_size, embedding_dim, hidden_size)

    # Weight preprocessing done ONCE, outside the per-call path.
    kp, head_sizes = prepare_kernel_params(params)
    forward = make_forward(head_sizes)

    x_init, x_final, x_cap = forward(params["embedding"], kp, tokens)
    jax.block_until_ready((x_init, x_final, x_cap))

    assert x_init.shape == (B, T, 2)
    assert x_final.shape == (B, T, 4)
    assert x_cap.shape == (B, T, 4)
    print("KERNEL_OK")
</pallas_src>

<mosaic_0001>
module attributes {stable_mosaic.version = 11 : i64} {
  func.func @kernel(%arg0: i32, %arg1: memref<8x8x128xf32, #tpu.memory_space<vmem>>, %arg2: memref<128x128xf32, #tpu.memory_space<vmem>>, %arg3: memref<128x128xf32, #tpu.memory_space<vmem>>, %arg4: memref<1x128xf32, #tpu.memory_space<vmem>>, %arg5: memref<256x128xf32, #tpu.memory_space<vmem>>, %arg6: memref<1x128xf32, #tpu.memory_space<vmem>>, %arg7: memref<256x128xf32, #tpu.memory_space<vmem>>, %arg8: memref<1x128xf32, #tpu.memory_space<vmem>>, %arg9: memref<8x8x128xf32, #tpu.memory_space<vmem>>, %arg10: memref<8x8x128xf32, #tpu.memory_space<vmem>>) attributes {dimension_semantics = [#tpu.dimension_semantics<parallel>], iteration_bounds = array<i64: 1>, scalar_prefetch = 0 : i64, scratch_operands = 1 : i64, tpu.core_type = #tpu.core_type<tc>, window_params = [{transform_indices = @transform_0, window_bounds = array<i64: 8, 8, 128>}, {pipeline_mode = #tpu.pipeline_mode<synchronous>, transform_indices = @transform_1, window_bounds = array<i64: 128, 128>}, {pipeline_mode = #tpu.pipeline_mode<synchronous>, transform_indices = @transform_2, window_bounds = array<i64: 128, 128>}, {pipeline_mode = #tpu.pipeline_mode<synchronous>, transform_indices = @transform_3, window_bounds = array<i64: 1, 128>}, {pipeline_mode = #tpu.pipeline_mode<synchronous>, transform_indices = @transform_4, window_bounds = array<i64: 256, 128>}, {pipeline_mode = #tpu.pipeline_mode<synchronous>, transform_indices = @transform_5, window_bounds = array<i64: 1, 128>}, {pipeline_mode = #tpu.pipeline_mode<synchronous>, transform_indices = @transform_6, window_bounds = array<i64: 256, 128>}, {pipeline_mode = #tpu.pipeline_mode<synchronous>, transform_indices = @transform_7, window_bounds = array<i64: 1, 128>}, {transform_indices = @transform_8, window_bounds = array<i64: 8, 8, 128>}]} {
    %c0 = arith.constant 0 : index
    %c0_0 = arith.constant 0 : index
    %0 = vector.load %arg3[%c0, %c0_0] : memref<128x128xf32, #tpu.memory_space<vmem>>, vector<128x128xf32>
    %c0_1 = arith.constant 0 : index
    %c0_2 = arith.constant 0 : index
    %1 = vector.load %arg5[%c0_1, %c0_2] : memref<256x128xf32, #tpu.memory_space<vmem>>, vector<256x128xf32>
    %c0_3 = arith.constant 0 : index
    %c0_4 = arith.constant 0 : index
    %2 = vector.load %arg6[%c0_3, %c0_4] : memref<1x128xf32, #tpu.memory_space<vmem>>, vector<1x128xf32>
    %c0_5 = arith.constant 0 : index
    %c0_6 = arith.constant 0 : index
    %3 = vector.load %arg7[%c0_5, %c0_6] : memref<256x128xf32, #tpu.memory_space<vmem>>, vector<256x128xf32>
    %c0_7 = arith.constant 0 : index
    %c0_8 = arith.constant 0 : index
    %4 = vector.load %arg8[%c0_7, %c0_8] : memref<1x128xf32, #tpu.memory_space<vmem>>, vector<1x128xf32>
    %c0_9 = arith.constant 0 : index
    %c0_10 = arith.constant 0 : index
    %c0_11 = arith.constant 0 : index
    %5 = vector.load %arg1[%c0_9, %c0_10, %c0_11] : memref<8x8x128xf32, #tpu.memory_space<vmem>>, vector<8x8x128xf32>
    %6 = vector.shape_cast %5 : vector<8x8x128xf32> to vector<64x128xf32>
    %c0_12 = arith.constant 0 : index
    %c0_13 = arith.constant 0 : index
    %7 = vector.load %arg2[%c0_12, %c0_13] : memref<128x128xf32, #tpu.memory_space<vmem>>, vector<128x128xf32>
    %cst = arith.constant dense<0.000000e+00> : vector<64x128xf32>
    %8 = tpu.matmul %6, %7, %cst {dimension_numbers = #tpu.dot_dimension_numbers<[1], [0], [0], [1], [0, 0, 1, 1], [], []>} : vector<64x128xf32>, vector<128x128xf32>, vector<64x128xf32> -> vector<64x128xf32>
    %c0_14 = arith.constant 0 : index
    %c0_15 = arith.constant 0 : index
    %9 = vector.load %arg4[%c0_14, %c0_15] : memref<1x128xf32, #tpu.memory_space<vmem>>, vector<1x128xf32>
    %10 = vector.broadcast %9 : vector<1x128xf32> to vector<64x128xf32>
    %11 = arith.addf %8, %10 : vector<64x128xf32>
    %12 = vector.shape_cast %11 : vector<64x128xf32> to vector<8x8x128xf32>
    %c0_16 = arith.constant 0 : index
    %c0_17 = arith.constant 0 : index
    %c0_18 = arith.constant 0 : index
    %13 = vector.load %arg10[%c0_16, %c0_17, %c0_18] : memref<8x8x128xf32, #tpu.memory_space<vmem>>, vector<8x8x128xf32>
    tpu.vector_store %arg10[%c0_16, %c0_17, %c0_18], %12 {strides = array<i32>} : memref<8x8x128xf32, #tpu.memory_space<vmem>>, vector<8x8x128xf32>,
    %cst_19 = arith.constant 0.000000e+00 : f32
    %14 = vector.broadcast %cst_19 : f32 to vector<8x128xf32>
    %cst_20 = arith.constant 0.000000e+00 : f32
    %15 = vector.broadcast %cst_20 : f32 to vector<8x128xf32>
    %cst_21 = arith.constant 0.000000e+00 : f32
    %16 = vector.broadcast %cst_21 : f32 to vector<8x128xf32>
    %c0_i32 = arith.constant 0 : i32
    %17 = arith.index_cast %c0_i32 : i32 to index
    %c0_22 = arith.constant 0 : index
    %c0_23 = arith.constant 0 : index
    %18 = vector.load %arg10[%17, %c0_22, %c0_23] : memref<8x8x128xf32, #tpu.memory_space<vmem>>, vector<1x8x128xf32>
    %19 = vector.shape_cast %18 : vector<1x8x128xf32> to vector<8x128xf32>
    %cst_24 = arith.constant dense<0.000000e+00> : vector<8x128xf32>
    %20 = tpu.matmul %14, %0, %cst_24 {dimension_numbers = #tpu.dot_dimension_numbers<[1], [0], [0], [1], [0, 0, 1, 1], [], []>} : vector<8x128xf32>, vector<128x128xf32>, vector<8x128xf32> -> vector<8x128xf32>
    %21 = arith.addf %19, %20 : vector<8x128xf32>
    %22 = math.tanh %21 : vector<8x128xf32>
    %23 = tpu.concatenate %22, %15 in 1 : vector<8x128xf32>, vector<8x128xf32> -> vector<8x256xf32>
    %cst_25 = arith.constant dense<0.000000e+00> : vector<8x128xf32>
    %24 = tpu.matmul %23, %1, %cst_25 {dimension_numbers = #tpu.dot_dimension_numbers<[1], [0], [0], [1], [0, 0, 1, 1], [], []>} : vector<8x256xf32>, vector<256x128xf32>, vector<8x128xf32> -> vector<8x128xf32>
    %25 = vector.broadcast %2 : vector<1x128xf32> to vector<8x128xf32>
    %26 = arith.addf %24, %25 : vector<8x128xf32>
    %27 = math.tanh %26 : vector<8x128xf32>
    %28 = tpu.concatenate %27, %16 in 1 : vector<8x128xf32>, vector<8x128xf32> -> vector<8x256xf32>
    %cst_26 = arith.constant dense<0.000000e+00> : vector<8x128xf32>
    %29 = tpu.matmul %28, %3, %cst_26 {dimension_numbers = #tpu.dot_dimension_numbers<[1], [0], [0], [1], [0, 0, 1, 1], [], []>} : vector<8x256xf32>, vector<256x128xf32>, vector<8x128xf32> -> vector<8x128xf32>
    %30 = vector.broadcast %4 : vector<1x128xf32> to vector<8x128xf32>
    %31 = arith.addf %29, %30 : vector<8x128xf32>
    %32 = math.tanh %31 : vector<8x128xf32>
    %33 = arith.index_cast %c0_i32 : i32 to index
    %c0_27 = arith.constant 0 : index
    %c0_28 = arith.constant 0 : index
    %34 = vector.load %arg9[%33, %c0_27, %c0_28] : memref<8x8x128xf32, #tpu.memory_space<vmem>>, vector<1x8x128xf32>
    %35 = vector.shape_cast %34 : vector<1x8x128xf32> to vector<8x128xf32>
    %36 = vector.shape_cast %32 : vector<8x128xf32> to vector<1x8x128xf32>
    tpu.vector_store %arg9[%33, %c0_27, %c0_28], %36 {strides = array<i32>} : memref<8x8x128xf32, #tpu.memory_space<vmem>>, vector<1x8x128xf32>,
    %c1_i32 = arith.constant 1 : i32
    %37 = arith.index_cast %c1_i32 : i32 to index
    %c0_29 = arith.constant 0 : index
    %c0_30 = arith.constant 0 : index
    %38 = vector.load %arg10[%37, %c0_29, %c0_30] : memref<8x8x128xf32, #tpu.memory_space<vmem>>, vector<1x8x128xf32>
    %39 = vector.shape_cast %38 : vector<1x8x128xf32> to vector<8x128xf32>
    %cst_31 = arith.constant dense<0.000000e+00> : vector<8x128xf32>
    %40 = tpu.matmul %22, %0, %cst_31 {dimension_numbers = #tpu.dot_dimension_numbers<[1], [0], [0], [1], [0, 0, 1, 1], [], []>} : vector<8x128xf32>, vector<128x128xf32>, vector<8x128xf32> -> vector<8x128xf32>
    %41 = arith.addf %39, %40 : vector<8x128xf32>
    %42 = math.tanh %41 : vector<8x128xf32>
    %43 = tpu.concatenate %42, %27 in 1 : vector<8x128xf32>, vector<8x128xf32> -> vector<8x256xf32>
    %cst_32 = arith.constant dense<0.000000e+00> : vector<8x128xf32>
    %44 = tpu.matmul %43, %1, %cst_32 {dimension_numbers = #tpu.dot_dimension_numbers<[1], [0], [0], [1], [0, 0, 1, 1], [], []>} : vector<8x256xf32>, vector<256x128xf32>, vector<8x128xf32> -> vector<8x128xf32>
    %45 = vector.broadcast %2 : vector<1x128xf32> to vector<8x128xf32>
    %46 = arith.addf %44, %45 : vector<8x128xf32>
    %47 = math.tanh %46 : vector<8x128xf32>
    %48 = tpu.concatenate %47, %32 in 1 : vector<8x128xf32>, vector<8x128xf32> -> vector<8x256xf32>
    %cst_33 = arith.constant dense<0.000000e+00> : vector<8x128xf32>
    %49 = tpu.matmul %48, %3, %cst_33 {dimension_numbers = #tpu.dot_dimension_numbers<[1], [0], [0], [1], [0, 0, 1, 1], [], []>} : vector<8x256xf32>, vector<256x128xf32>, vector<8x128xf32> -> vector<8x128xf32>
    %50 = vector.broadcast %4 : vector<1x128xf32> to vector<8x128xf32>
    %51 = arith.addf %49, %50 : vector<8x128xf32>
    %52 = math.tanh %51 : vector<8x128xf32>
    %53 = arith.index_cast %c1_i32 : i32 to index
    %c0_34 = arith.constant 0 : index
    %c0_35 = arith.constant 0 : index
    %54 = vector.load %arg9[%53, %c0_34, %c0_35] : memref<8x8x128xf32, #tpu.memory_space<vmem>>, vector<1x8x128xf32>
    %55 = vector.shape_cast %54 : vector<1x8x128xf32> to vector<8x128xf32>
    %56 = vector.shape_cast %52 : vector<8x128xf32> to vector<1x8x128xf32>
    tpu.vector_store %arg9[%53, %c0_34, %c0_35], %56 {strides = array<i32>} : memref<8x8x128xf32, #tpu.memory_space<vmem>>, vector<1x8x128xf32>,
    %c2_i32 = arith.constant 2 : i32
    %57 = arith.index_cast %c2_i32 : i32 to index
    %c0_36 = arith.constant 0 : index
    %c0_37 = arith.constant 0 : index
    %58 = vector.load %arg10[%57, %c0_36, %c0_37] : memref<8x8x128xf32, #tpu.memory_space<vmem>>, vector<1x8x128xf32>
    %59 = vector.shape_cast %58 : vector<1x8x128xf32> to vector<8x128xf32>
    %cst_38 = arith.constant dense<0.000000e+00> : vector<8x128xf32>
    %60 = tpu.matmul %42, %0, %cst_38 {dimension_numbers = #tpu.dot_dimension_numbers<[1], [0], [0], [1], [0, 0, 1, 1], [], []>} : vector<8x128xf32>, vector<128x128xf32>, vector<8x128xf32> -> vector<8x128xf32>
    %61 = arith.addf %59, %60 : vector<8x128xf32>
    %62 = math.tanh %61 : vector<8x128xf32>
    %63 = tpu.concatenate %62, %47 in 1 : vector<8x128xf32>, vector<8x128xf32> -> vector<8x256xf32>
    %cst_39 = arith.constant dense<0.000000e+00> : vector<8x128xf32>
    %64 = tpu.matmul %63, %1, %cst_39 {dimension_numbers = #tpu.dot_dimension_numbers<[1], [0], [0], [1], [0, 0, 1, 1], [], []>} : vector<8x256xf32>, vector<256x128xf32>, vector<8x128xf32> -> vector<8x128xf32>
    %65 = vector.broadcast %2 : vector<1x128xf32> to vector<8x128xf32>
    %66 = arith.addf %64, %65 : vector<8x128xf32>
    %67 = math.tanh %66 : vector<8x128xf32>
    %68 = tpu.concatenate %67, %52 in 1 : vector<8x128xf32>, vector<8x128xf32> -> vector<8x256xf32>
    %cst_40 = arith.constant dense<0.000000e+00> : vector<8x128xf32>
    %69 = tpu.matmul %68, %3, %cst_40 {dimension_numbers = #tpu.dot_dimension_numbers<[1], [0], [0], [1], [0, 0, 1, 1], [], []>} : vector<8x256xf32>, vector<256x128xf32>, vector<8x128xf32> -> vector<8x128xf32>
    %70 = vector.broadcast %4 : vector<1x128xf32> to vector<8x128xf32>
    %71 = arith.addf %69, %70 : vector<8x128xf32>
    %72 = math.tanh %71 : vector<8x128xf32>
    %73 = arith.index_cast %c2_i32 : i32 to index
    %c0_41 = arith.constant 0 : index
    %c0_42 = arith.constant 0 : index
    %74 = vector.load %arg9[%73, %c0_41, %c0_42] : memref<8x8x128xf32, #tpu.memory_space<vmem>>, vector<1x8x128xf32>
    %75 = vector.shape_cast %74 : vector<1x8x128xf32> to vector<8x128xf32>
    %76 = vector.shape_cast %72 : vector<8x128xf32> to vector<1x8x128xf32>
    tpu.vector_store %arg9[%73, %c0_41, %c0_42], %76 {strides = array<i32>} : memref<8x8x128xf32, #tpu.memory_space<vmem>>, vector<1x8x128xf32>,
    %c3_i32 = arith.constant 3 : i32
    %77 = arith.index_cast %c3_i32 : i32 to index
    %c0_43 = arith.constant 0 : index
    %c0_44 = arith.constant 0 : index
    %78 = vector.load %arg10[%77, %c0_43, %c0_44] : memref<8x8x128xf32, #tpu.memory_space<vmem>>, vector<1x8x128xf32>
    %79 = vector.shape_cast %78 : vector<1x8x128xf32> to vector<8x128xf32>
    %cst_45 = arith.constant dense<0.000000e+00> : vector<8x128xf32>
    %80 = tpu.matmul %62, %0, %cst_45 {dimension_numbers = #tpu.dot_dimension_numbers<[1], [0], [0], [1], [0, 0, 1, 1], [], []>} : vector<8x128xf32>, vector<128x128xf32>, vector<8x128xf32> -> vector<8x128xf32>
    %81 = arith.addf %79, %80 : vector<8x128xf32>
    %82 = math.tanh %81 : vector<8x128xf32>
    %83 = tpu.concatenate %82, %67 in 1 : vector<8x128xf32>, vector<8x128xf32> -> vector<8x256xf32>
    %cst_46 = arith.constant dense<0.000000e+00> : vector<8x128xf32>
    %84 = tpu.matmul %83, %1, %cst_46 {dimension_numbers = #tpu.dot_dimension_numbers<[1], [0], [0], [1], [0, 0, 1, 1], [], []>} : vector<8x256xf32>, vector<256x128xf32>, vector<8x128xf32> -> vector<8x128xf32>
    %85 = vector.broadcast %2 : vector<1x128xf32> to vector<8x128xf32>
    %86 = arith.addf %84, %85 : vector<8x128xf32>
    %87 = math.tanh %86 : vector<8x128xf32>
    %88 = tpu.concatenate %87, %72 in 1 : vector<8x128xf32>, vector<8x128xf32> -> vector<8x256xf32>
    %cst_47 = arith.constant dense<0.000000e+00> : vector<8x128xf32>
    %89 = tpu.matmul %88, %3, %cst_47 {dimension_numbers = #tpu.dot_dimension_numbers<[1], [0], [0], [1], [0, 0, 1, 1], [], []>} : vector<8x256xf32>, vector<256x128xf32>, vector<8x128xf32> -> vector<8x128xf32>
    %90 = vector.broadcast %4 : vector<1x128xf32> to vector<8x128xf32>
    %91 = arith.addf %89, %90 : vector<8x128xf32>
    %92 = math.tanh %91 : vector<8x128xf32>
    %93 = arith.index_cast %c3_i32 : i32 to index
    %c0_48 = arith.constant 0 : index
    %c0_49 = arith.constant 0 : index
    %94 = vector.load %arg9[%93, %c0_48, %c0_49] : memref<8x8x128xf32, #tpu.memory_space<vmem>>, vector<1x8x128xf32>
    %95 = vector.shape_cast %94 : vector<1x8x128xf32> to vector<8x128xf32>
    %96 = vector.shape_cast %92 : vector<8x128xf32> to vector<1x8x128xf32>
    tpu.vector_store %arg9[%93, %c0_48, %c0_49], %96 {strides = array<i32>} : memref<8x8x128xf32, #tpu.memory_space<vmem>>, vector<1x8x128xf32>,
    %c4_i32 = arith.constant 4 : i32
    %97 = arith.index_cast %c4_i32 : i32 to index
    %c0_50 = arith.constant 0 : index
    %c0_51 = arith.constant 0 : index
    %98 = vector.load %arg10[%97, %c0_50, %c0_51] : memref<8x8x128xf32, #tpu.memory_space<vmem>>, vector<1x8x128xf32>
    %99 = vector.shape_cast %98 : vector<1x8x128xf32> to vector<8x128xf32>
    %cst_52 = arith.constant dense<0.000000e+00> : vector<8x128xf32>
    %100 = tpu.matmul %82, %0, %cst_52 {dimension_numbers = #tpu.dot_dimension_numbers<[1], [0], [0], [1], [0, 0, 1, 1], [], []>} : vector<8x128xf32>, vector<128x128xf32>, vector<8x128xf32> -> vector<8x128xf32>
    %101 = arith.addf %99, %100 : vector<8x128xf32>
    %102 = math.tanh %101 : vector<8x128xf32>
    %103 = tpu.concatenate %102, %87 in 1 : vector<8x128xf32>, vector<8x128xf32> -> vector<8x256xf32>
    %cst_53 = arith.constant dense<0.000000e+00> : vector<8x128xf32>
    %104 = tpu.matmul %103, %1, %cst_53 {dimension_numbers = #tpu.dot_dimension_numbers<[1], [0], [0], [1], [0, 0, 1, 1], [], []>} : vector<8x256xf32>, vector<256x128xf32>, vector<8x128xf32> -> vector<8x128xf32>
    %105 = vector.broadcast %2 : vector<1x128xf32> to vector<8x128xf32>
    %106 = arith.addf %104, %105 : vector<8x128xf32>
    %107 = math.tanh %106 : vector<8x128xf32>
    %108 = tpu.concatenate %107, %92 in 1 : vector<8x128xf32>, vector<8x128xf32> -> vector<8x256xf32>
    %cst_54 = arith.constant dense<0.000000e+00> : vector<8x128xf32>
    %109 = tpu.matmul %108, %3, %cst_54 {dimension_numbers = #tpu.dot_dimension_numbers<[1], [0], [0], [1], [0, 0, 1, 1], [], []>} : vector<8x256xf32>, vector<256x128xf32>, vector<8x128xf32> -> vector<8x128xf32>
    %110 = vector.broadcast %4 : vector<1x128xf32> to vector<8x128xf32>
    %111 = arith.addf %109, %110 : vector<8x128xf32>
    %112 = math.tanh %111 : vector<8x128xf32>
    %113 = arith.index_cast %c4_i32 : i32 to index
    %c0_55 = arith.constant 0 : index
    %c0_56 = arith.constant 0 : index
    %114 = vector.load %arg9[%113, %c0_55, %c0_56] : memref<8x8x128xf32, #tpu.memory_space<vmem>>, vector<1x8x128xf32>
    %115 = vector.shape_cast %114 : vector<1x8x128xf32> to vector<8x128xf32>
    %116 = vector.shape_cast %112 : vector<8x128xf32> to vector<1x8x128xf32>
    tpu.vector_store %arg9[%113, %c0_55, %c0_56], %116 {strides = array<i32>} : memref<8x8x128xf32, #tpu.memory_space<vmem>>, vector<1x8x128xf32>,
    %c5_i32 = arith.constant 5 : i32
    %117 = arith.index_cast %c5_i32 : i32 to index
    %c0_57 = arith.constant 0 : index
    %c0_58 = arith.constant 0 : index
    %118 = vector.load %arg10[%117, %c0_57, %c0_58] : memref<8x8x128xf32, #tpu.memory_space<vmem>>, vector<1x8x128xf32>
    %119 = vector.shape_cast %118 : vector<1x8x128xf32> to vector<8x128xf32>
    %cst_59 = arith.constant dense<0.000000e+00> : vector<8x128xf32>
    %120 = tpu.matmul %102, %0, %cst_59 {dimension_numbers = #tpu.dot_dimension_numbers<[1], [0], [0], [1], [0, 0, 1, 1], [], []>} : vector<8x128xf32>, vector<128x128xf32>, vector<8x128xf32> -> vector<8x128xf32>
    %121 = arith.addf %119, %120 : vector<8x128xf32>
    %122 = math.tanh %121 : vector<8x128xf32>
    %123 = tpu.concatenate %122, %107 in 1 : vector<8x128xf32>, vector<8x128xf32> -> vector<8x256xf32>
    %cst_60 = arith.constant dense<0.000000e+00> : vector<8x128xf32>
    %124 = tpu.matmul %123, %1, %cst_60 {dimension_numbers = #tpu.dot_dimension_numbers<[1], [0], [0], [1], [0, 0, 1, 1], [], []>} : vector<8x256xf32>, vector<256x128xf32>, vector<8x128xf32> -> vector<8x128xf32>
    %125 = vector.broadcast %2 : vector<1x128xf32> to vector<8x128xf32>
    %126 = arith.addf %124, %125 : vector<8x128xf32>
    %127 = math.tanh %126 : vector<8x128xf32>
    %128 = tpu.concatenate %127, %112 in 1 : vector<8x128xf32>, vector<8x128xf32> -> vector<8x256xf32>
    %cst_61 = arith.constant dense<0.000000e+00> : vector<8x128xf32>
    %129 = tpu.matmul %128, %3, %cst_61 {dimension_numbers = #tpu.dot_dimension_numbers<[1], [0], [0], [1], [0, 0, 1, 1], [], []>} : vector<8x256xf32>, vector<256x128xf32>, vector<8x128xf32> -> vector<8x128xf32>
    %130 = vector.broadcast %4 : vector<1x128xf32> to vector<8x128xf32>
    %131 = arith.addf %129, %130 : vector<8x128xf32>
    %132 = math.tanh %131 : vector<8x128xf32>
    %133 = arith.index_cast %c5_i32 : i32 to index
    %c0_62 = arith.constant 0 : index
    %c0_63 = arith.constant 0 : index
    %134 = vector.load %arg9[%133, %c0_62, %c0_63] : memref<8x8x128xf32, #tpu.memory_space<vmem>>, vector<1x8x128xf32>
    %135 = vector.shape_cast %134 : vector<1x8x128xf32> to vector<8x128xf32>
    %136 = vector.shape_cast %132 : vector<8x128xf32> to vector<1x8x128xf32>
    tpu.vector_store %arg9[%133, %c0_62, %c0_63], %136 {strides = array<i32>} : memref<8x8x128xf32, #tpu.memory_space<vmem>>, vector<1x8x128xf32>,
    %c6_i32 = arith.constant 6 : i32
    %137 = arith.index_cast %c6_i32 : i32 to index
    %c0_64 = arith.constant 0 : index
    %c0_65 = arith.constant 0 : index
    %138 = vector.load %arg10[%137, %c0_64, %c0_65] : memref<8x8x128xf32, #tpu.memory_space<vmem>>, vector<1x8x128xf32>
    %139 = vector.shape_cast %138 : vector<1x8x128xf32> to vector<8x128xf32>
    %cst_66 = arith.constant dense<0.000000e+00> : vector<8x128xf32>
    %140 = tpu.matmul %122, %0, %cst_66 {dimension_numbers = #tpu.dot_dimension_numbers<[1], [0], [0], [1], [0, 0, 1, 1], [], []>} : vector<8x128xf32>, vector<128x128xf32>, vector<8x128xf32> -> vector<8x128xf32>
    %141 = arith.addf %139, %140 : vector<8x128xf32>
    %142 = math.tanh %141 : vector<8x128xf32>
    %143 = tpu.concatenate %142, %127 in 1 : vector<8x128xf32>, vector<8x128xf32> -> vector<8x256xf32>
    %cst_67 = arith.constant dense<0.000000e+00> : vector<8x128xf32>
    %144 = tpu.matmul %143, %1, %cst_67 {dimension_numbers = #tpu.dot_dimension_numbers<[1], [0], [0], [1], [0, 0, 1, 1], [], []>} : vector<8x256xf32>, vector<256x128xf32>, vector<8x128xf32> -> vector<8x128xf32>
    %145 = vector.broadcast %2 : vector<1x128xf32> to vector<8x128xf32>
    %146 = arith.addf %144, %145 : vector<8x128xf32>
    %147 = math.tanh %146 : vector<8x128xf32>
    %148 = tpu.concatenate %147, %132 in 1 : vector<8x128xf32>, vector<8x128xf32> -> vector<8x256xf32>
    %cst_68 = arith.constant dense<0.000000e+00> : vector<8x128xf32>
    %149 = tpu.matmul %148, %3, %cst_68 {dimension_numbers = #tpu.dot_dimension_numbers<[1], [0], [0], [1], [0, 0, 1, 1], [], []>} : vector<8x256xf32>, vector<256x128xf32>, vector<8x128xf32> -> vector<8x128xf32>
    %150 = vector.broadcast %4 : vector<1x128xf32> to vector<8x128xf32>
    %151 = arith.addf %149, %150 : vector<8x128xf32>
    %152 = math.tanh %151 : vector<8x128xf32>
    %153 = arith.index_cast %c6_i32 : i32 to index
    %c0_69 = arith.constant 0 : index
    %c0_70 = arith.constant 0 : index
    %154 = vector.load %arg9[%153, %c0_69, %c0_70] : memref<8x8x128xf32, #tpu.memory_space<vmem>>, vector<1x8x128xf32>
    %155 = vector.shape_cast %154 : vector<1x8x128xf32> to vector<8x128xf32>
    %156 = vector.shape_cast %152 : vector<8x128xf32> to vector<1x8x128xf32>
    tpu.vector_store %arg9[%153, %c0_69, %c0_70], %156 {strides = array<i32>} : memref<8x8x128xf32, #tpu.memory_space<vmem>>, vector<1x8x128xf32>,
    %c7_i32 = arith.constant 7 : i32
    %157 = arith.index_cast %c7_i32 : i32 to index
    %c0_71 = arith.constant 0 : index
    %c0_72 = arith.constant 0 : index
    %158 = vector.load %arg10[%157, %c0_71, %c0_72] : memref<8x8x128xf32, #tpu.memory_space<vmem>>, vector<1x8x128xf32>
    %159 = vector.shape_cast %158 : vector<1x8x128xf32> to vector<8x128xf32>
    %cst_73 = arith.constant dense<0.000000e+00> : vector<8x128xf32>
    %160 = tpu.matmul %142, %0, %cst_73 {dimension_numbers = #tpu.dot_dimension_numbers<[1], [0], [0], [1], [0, 0, 1, 1], [], []>} : vector<8x128xf32>, vector<128x128xf32>, vector<8x128xf32> -> vector<8x128xf32>
    %161 = arith.addf %159, %160 : vector<8x128xf32>
    %162 = math.tanh %161 : vector<8x128xf32>
    %163 = tpu.concatenate %162, %147 in 1 : vector<8x128xf32>, vector<8x128xf32> -> vector<8x256xf32>
    %cst_74 = arith.constant dense<0.000000e+00> : vector<8x128xf32>
    %164 = tpu.matmul %163, %1, %cst_74 {dimension_numbers = #tpu.dot_dimension_numbers<[1], [0], [0], [1], [0, 0, 1, 1], [], []>} : vector<8x256xf32>, vector<256x128xf32>, vector<8x128xf32> -> vector<8x128xf32>
    %165 = vector.broadcast %2 : vector<1x128xf32> to vector<8x128xf32>
    %166 = arith.addf %164, %165 : vector<8x128xf32>
    %167 = math.tanh %166 : vector<8x128xf32>
    %168 = tpu.concatenate %167, %152 in 1 : vector<8x128xf32>, vector<8x128xf32> -> vector<8x256xf32>
    %cst_75 = arith.constant dense<0.000000e+00> : vector<8x128xf32>
    %169 = tpu.matmul %168, %3, %cst_75 {dimension_numbers = #tpu.dot_dimension_numbers<[1], [0], [0], [1], [0, 0, 1, 1], [], []>} : vector<8x256xf32>, vector<256x128xf32>, vector<8x128xf32> -> vector<8x128xf32>
    %170 = vector.broadcast %4 : vector<1x128xf32> to vector<8x128xf32>
    %171 = arith.addf %169, %170 : vector<8x128xf32>
    %172 = math.tanh %171 : vector<8x128xf32>
    %173 = arith.index_cast %c7_i32 : i32 to index
    %c0_76 = arith.constant 0 : index
    %c0_77 = arith.constant 0 : index
    %174 = vector.load %arg9[%173, %c0_76, %c0_77] : memref<8x8x128xf32, #tpu.memory_space<vmem>>, vector<1x8x128xf32>
    %175 = vector.shape_cast %174 : vector<1x8x128xf32> to vector<8x128xf32>
    %176 = vector.shape_cast %172 : vector<8x128xf32> to vector<1x8x128xf32>
    tpu.vector_store %arg9[%173, %c0_76, %c0_77], %176 {strides = array<i32>} : memref<8x8x128xf32, #tpu.memory_space<vmem>>, vector<1x8x128xf32>,
    %c8_i32 = arith.constant 8 : i32
    return
  }
  func.func @transform_0(%arg0: i32) -> (i32, i32, i32) {
    %c0_i32 = arith.constant 0 : i32
    %c0_i32_0 = arith.constant 0 : i32
    %c0_i32_1 = arith.constant 0 : i32
    return %c0_i32, %arg0, %c0_i32_0 : i32, i32, i32
  }
  func.func @transform_1(%arg0: i32) -> (i32, i32) {
    %c0_i32 = arith.constant 0 : i32
    %c0_i32_0 = arith.constant 0 : i32
    %c0_i32_1 = arith.constant 0 : i32
    return %c0_i32, %c0_i32_0 : i32, i32
  }
  func.func @transform_2(%arg0: i32) -> (i32, i32) {
    %c0_i32 = arith.constant 0 : i32
    %c0_i32_0 = arith.constant 0 : i32
    %c0_i32_1 = arith.constant 0 : i32
    return %c0_i32, %c0_i32_0 : i32, i32
  }
  func.func @transform_3(%arg0: i32) -> (i32, i32) {
    %c0_i32 = arith.constant 0 : i32
    %c0_i32_0 = arith.constant 0 : i32
    %c0_i32_1 = arith.constant 0 : i32
    return %c0_i32, %c0_i32_0 : i32, i32
  }
  func.func @transform_4(%arg0: i32) -> (i32, i32) {
    %c0_i32 = arith.constant 0 : i32
    %c0_i32_0 = arith.constant 0 : i32
    %c0_i32_1 = arith.constant 0 : i32
    return %c0_i32, %c0_i32_0 : i32, i32
  }
  func.func @transform_5(%arg0: i32) -> (i32, i32) {
    %c0_i32 = arith.constant 0 : i32
    %c0_i32_0 = arith.constant 0 : i32
    %c0_i32_1 = arith.constant 0 : i32
    return %c0_i32, %c0_i32_0 : i32, i32
  }
  func.func @transform_6(%arg0: i32) -> (i32, i32) {
    %c0_i32 = arith.constant 0 : i32
    %c0_i32_0 = arith.constant 0 : i32
    %c0_i32_1 = arith.constant 0 : i32
    return %c0_i32, %c0_i32_0 : i32, i32
  }
  func.func @transform_7(%arg0: i32) -> (i32, i32) {
    %c0_i32 = arith.constant 0 : i32
    %c0_i32_0 = arith.constant 0 : i32
    %c0_i32_1 = arith.constant 0 : i32
    return %c0_i32, %c0_i32_0 : i32, i32
  }
  func.func @transform_8(%arg0: i32) -> (i32, i32, i32) {
    %c0_i32 = arith.constant 0 : i32
    %c0_i32_0 = arith.constant 0 : i32
    %c0_i32_1 = arith.constant 0 : i32
    return %c0_i32, %arg0, %c0_i32_0 : i32, i32, i32
  }
}

</mosaic_0001>

<llo_original>
// kernel: forward.1
$region0: #{forward.1}
  #allocation0 [shape = 'u32[]', space=smem, size = 0x4, offset = 0x4, fixed_abs, tag = 'smem constant byte address 0x4 - core index']
  #allocation1 [shape = 'u32[72,128]{1,0:T(1,128)}', space=vmem, size = 0x9000, scoped, tag = 'internal scratch']
  #allocation2 [shape = 'f32[8,8,128]{2,1,0:T(8,128)}', space=vmem, size = 0x8000, scoped, tag = 'scratch operand']
  %s0 = inlined_call_operand.vmem [shape: f32[8,8,128], index: 0, kind: input, shape index: {}]
  %s1 = inlined_call_operand.hbm [shape: f32[128,128], index: 1, kind: input, shape index: {}]
  %s2 = inlined_call_operand.hbm [shape: f32[128,128], index: 2, kind: input, shape index: {}]
  %s3 = inlined_call_operand.vmem [shape: f32[1,128], index: 3, kind: input, shape index: {}]
  %s4 = inlined_call_operand.vmem [shape: f32[256,128], index: 4, kind: input, shape index: {}]
  %s5 = inlined_call_operand.vmem [shape: f32[1,128], index: 5, kind: input, shape index: {}]
  %s6 = inlined_call_operand.hbm [shape: f32[256,128], index: 6, kind: input, shape index: {}]
  %s7 = inlined_call_operand.vmem [shape: f32[1,128], index: 7, kind: input, shape index: {}]
  %s8 = inlined_call_operand.vmem [shape: f32[8,8,128], index: 8, kind: output, shape index: {}]
  %s9 = sld [smem:[#allocation0]]
  $region54: #{forward.1} parent=0
    _
  %s11 = ssub.s32 1, %s9
  %s12 = scalar_select 0, %s11, %s9
  $region1: #{forward.1} parent=0
    #allocation3 [shape = 'u8[65536]{0}', space=vmem, size = 0x10000, scoped, tag = 'input window, operand 1, single buffered']
    #allocation4 [shape = 's32[1]{0}', space=sflag, size = 0x4, scoped, tag = 'scoped memory for forward.1']
    #allocation5 [shape = 'u8[65536]{0}', space=vmem, size = 0x10000, scoped, tag = 'input window, operand 2, single buffered']
    #allocation6 [shape = 's32[1]{0}', space=sflag, size = 0x4, scoped, tag = 'scoped memory for forward.1']
    #allocation7 [shape = 'u8[131072]{0}', space=vmem, size = 0x20000, scoped, tag = 'input window, operand 6, single buffered']
    %13 = vsyncpa [#allocation4], 0
    %14 = vsyncpa [#allocation6], 0
    // Predicated region
    $region2: #{forward.1} parent=1 // pred_check
      _
    $region3: #{forward.1} parent=1 // pred_check_branch
      %16 = sbr.rel (0) target = $region5
    $region4: #{forward.1} parent=1 // pred_region
      _
    $region5: #{forward.1} parent=1 // pred_fallthru
      _
    // Predicated region
    $region6: #{forward.1} parent=1 // pred_check
      _
    $region7: #{forward.1} parent=1 // pred_check_branch
      %18 = sbr.rel (0) target = $region9
    $region8: #{forward.1} parent=1 // pred_region
      %20 = vsyncadd [#allocation4], 0
      %s21 = sshll.u32 %s1, 4
      %s22 = int_to_ptr.hbm [resolvable:$true] %s21
      %s23 = sshll.u32 [#allocation3], 4
      %s24 = int_to_ptr.vmem [resolvable:$true] %s23
      %29 = dma.hbm_to_vmem [thread:$0]  %s22, 2048, %s24, [#allocation4], 128, 128, 8
    $region9: #{forward.1} parent=1 // pred_fallthru
      _
    // Predicated region
    $region10: #{forward.1} parent=1 // pred_check
      _
    $region11: #{forward.1} parent=1 // pred_check_branch
      %31 = sbr.rel (0) target = $region13
    $region12: #{forward.1} parent=1 // pred_region
      %33 = vsyncadd [#allocation6], 0
      %s34 = sshll.u32 %s2, 4
      %s35 = int_to_ptr.hbm [resolvable:$true] %s34
      %s36 = sshll.u32 [#allocation5], 4
      %s37 = int_to_ptr.vmem [resolvable:$true] %s36
      %42 = dma.hbm_to_vmem [thread:$0]  %s35, 2048, %s37, [#allocation6], 128, 128, 8
    $region13: #{forward.1} parent=1 // pred_fallthru
      _
    // Predicated region
    $region14: #{forward.1} parent=1 // pred_check
      _
    $region15: #{forward.1} parent=1 // pred_check_branch
      %44 = sbr.rel (0) target = $region17
    $region16: #{forward.1} parent=1 // pred_region
      _
    $region17: #{forward.1} parent=1 // pred_fallthru
      _
    // Predicated region
    $region18: #{forward.1} parent=1 // pred_check
      _
    $region19: #{forward.1} parent=1 // pred_check_branch
      %46 = sbr.rel (0) target = $region21
    $region20: #{forward.1} parent=1 // pred_region
      _
    $region21: #{forward.1} parent=1 // pred_fallthru
      _
    // Predicated region
    $region22: #{forward.1} parent=1 // pred_check
      _
    $region23: #{forward.1} parent=1 // pred_check_branch
      %48 = sbr.rel (0) target = $region25
    $region24: #{forward.1} parent=1 // pred_region
      _
    $region25: #{forward.1} parent=1 // pred_fallthru
      _
    // Predicated region
    $region26: #{forward.1} parent=1 // pred_check
      _
    $region27: #{forward.1} parent=1 // pred_check_branch
      %50 = sbr.rel (0) target = $region29
    $region28: #{forward.1} parent=1 // pred_region
      %52 = vsyncadd [#allocation6], 0
      %s53 = sshll.u32 %s6, 4
      %s54 = int_to_ptr.hbm [resolvable:$true] %s53
      %s55 = sshll.u32 [#allocation7], 4
      %s56 = int_to_ptr.vmem [resolvable:$true] %s55
      %61 = dma.hbm_to_vmem [thread:$0]  %s54, 4096, %s56, [#allocation6], 128, 128, 8
    $region29: #{forward.1} parent=1 // pred_fallthru
      _
    // Predicated region
    $region30: #{forward.1} parent=1 // pred_check
      _
    $region31: #{forward.1} parent=1 // pred_check_branch
      %63 = sbr.rel (0) target = $region33
    $region32: #{forward.1} parent=1 // pred_region
      _
    $region33: #{forward.1} parent=1 // pred_fallthru
      _
    // Predicated region
    $region34: #{forward.1} parent=1 // pred_check
      _
    $region35: #{forward.1} parent=1 // pred_check_branch
      %65 = sbr.rel (0) target = $region37
    $region36: #{forward.1} parent=1 // pred_region
      %67 = dma.done [#allocation4], 2048
    $region37: #{forward.1} parent=1 // pred_fallthru
      _
    // Predicated region
    $region38: #{forward.1} parent=1 // pred_check
      _
    $region39: #{forward.1} parent=1 // pred_check_branch
      %69 = sbr.rel (0) target = $region41
    $region40: #{forward.1} parent=1 // pred_region
      %71 = dma.done [#allocation6], 2048
    $region41: #{forward.1} parent=1 // pred_fallthru
      _
    // Predicated region
    $region42: #{forward.1} parent=1 // pred_check
      _
    $region43: #{forward.1} parent=1 // pred_check_branch
      %73 = sbr.rel (0) target = $region45
    $region44: #{forward.1} parent=1 // pred_region
      %75 = dma.done [#allocation6], 4096
    $region45: #{forward.1} parent=1 // pred_fallthru
      _
    %v76 = vld [vmem:[#allocation5] sm:$0xff]
    %v77 = vld [vmem:[#allocation5 + $0x8] sm:$0xff]
    %v78 = vld [vmem:[#allocation5 + $0x10] sm:$0xff]
    %v79 = vld [vmem:[#allocation5 + $0x18] sm:$0xff]
    %v80 = vld [vmem:[#allocation5 + $0x20] sm:$0xff]
    %v81 = vld [vmem:[#allocation5 + $0x28] sm:$0xff]
    %v82 = vld [vmem:[#allocation5 + $0x30] sm:$0xff]
    %v83 = vld [vmem:[#allocation5 + $0x38] sm:$0xff]
    %v84 = vld [vmem:[#allocation5 + $0x40] sm:$0xff]
    %v85 = vld [vmem:[#allocation5 + $0x48] sm:$0xff]
    %v86 = vld [vmem:[#allocation5 + $0x50] sm:$0xff]
    %v87 = vld [vmem:[#allocation5 + $0x58] sm:$0xff]
    %v88 = vld [vmem:[#allocation5 + $0x60] sm:$0xff]
    %v89 = vld [vmem:[#allocation5 + $0x68] sm:$0xff]
    %v90 = vld [vmem:[#allocation5 + $0x70] sm:$0xff]
    %v91 = vld [vmem:[#allocation5 + $0x78] sm:$0xff]
    %v92 = vld [vmem:[%s4] sm:$0xff]
    %v93 = vld [vmem:[%s4 + $0x8] sm:$0xff]
    %v94 = vld [vmem:[%s4 + $0x10] sm:$0xff]
    %v95 = vld [vmem:[%s4 + $0x18] sm:$0xff]
    %v96 = vld [vmem:[%s4 + $0x20] sm:$0xff]
    %v97 = vld [vmem:[%s4 + $0x28] sm:$0xff]
    %v98 = vld [vmem:[%s4 + $0x30] sm:$0xff]
    %v99 = vld [vmem:[%s4 + $0x38] sm:$0xff]
    %v100 = vld [vmem:[%s4 + $0x40] sm:$0xff]
    %v101 = vld [vmem:[%s4 + $0x48] sm:$0xff]
    %v102 = vld [vmem:[%s4 + $0x50] sm:$0xff]
    %v103 = vld [vmem:[%s4 + $0x58] sm:$0xff]
    %v104 = vld [vmem:[%s4 + $0x60] sm:$0xff]
    %v105 = vld [vmem:[%s4 + $0x68] sm:$0xff]
    %v106 = vld [vmem:[%s4 + $0x70] sm:$0xff]
    %v107 = vld [vmem:[%s4 + $0x78] sm:$0xff]
    %v108 = vld [vmem:[%s4 + $0x80] sm:$0xff]
    %v109 = vld [vmem:[%s4 + $0x88] sm:$0xff]
    %v110 = vld [vmem:[%s4 + $0x90] sm:$0xff]
    %v111 = vld [vmem:[%s4 + $0x98] sm:$0xff]
    %v112 = vld [vmem:[%s4 + $0xa0] sm:$0xff]
    %v113 = vld [vmem:[%s4 + $0xa8] sm:$0xff]
    %v114 = vld [vmem:[%s4 + $0xb0] sm:$0xff]
    %v115 = vld [vmem:[%s4 + $0xb8] sm:$0xff]
    %v116 = vld [vmem:[%s4 + $0xc0] sm:$0xff]
    %v117 = vld [vmem:[%s4 + $0xc8] sm:$0xff]
    %v118 = vld [vmem:[%s4 + $0xd0] sm:$0xff]
    %v119 = vld [vmem:[%s4 + $0xd8] sm:$0xff]
    %v120 = vld [vmem:[%s4 + $0xe0] sm:$0xff]
    %v121 = vld [vmem:[%s4 + $0xe8] sm:$0xff]
    %v122 = vld [vmem:[%s4 + $0xf0] sm:$0xff]
    %v123 = vld [vmem:[%s4 + $0xf8] sm:$0xff]
    %v124 = vld [vmem:[%s5] sm:$0x1]
    %v125 = vld [vmem:[#allocation7] sm:$0xff]
    %v126 = vld [vmem:[#allocation7 + $0x8] sm:$0xff]
    %v127 = vld [vmem:[#allocation7 + $0x10] sm:$0xff]
    %v128 = vld [vmem:[#allocation7 + $0x18] sm:$0xff]
    %v129 = vld [vmem:[#allocation7 + $0x20] sm:$0xff]
    %v130 = vld [vmem:[#allocation7 + $0x28] sm:$0xff]
    %v131 = vld [vmem:[#allocation7 + $0x30] sm:$0xff]
    %v132 = vld [vmem:[#allocation7 + $0x38] sm:$0xff]
    %v133 = vld [vmem:[#allocation7 + $0x40] sm:$0xff]
    %v134 = vld [vmem:[#allocation7 + $0x48] sm:$0xff]
    %v135 = vld [vmem:[#allocation7 + $0x50] sm:$0xff]
    %v136 = vld [vmem:[#allocation7 + $0x58] sm:$0xff]
    %v137 = vld [vmem:[#allocation7 + $0x60] sm:$0xff]
    %v138 = vld [vmem:[#allocation7 + $0x68] sm:$0xff]
    %v139 = vld [vmem:[#allocation7 + $0x70] sm:$0xff]
    %v140 = vld [vmem:[#allocation7 + $0x78] sm:$0xff]
    %v141 = vld [vmem:[#allocation7 + $0x80] sm:$0xff]
    %v142 = vld [vmem:[#allocation7 + $0x88] sm:$0xff]
    %v143 = vld [vmem:[#allocation7 + $0x90] sm:$0xff]
    %v144 = vld [vmem:[#allocation7 + $0x98] sm:$0xff]
    %v145 = vld [vmem:[#allocation7 + $0xa0] sm:$0xff]
    %v146 = vld [vmem:[#allocation7 + $0xa8] sm:$0xff]
    %v147 = vld [vmem:[#allocation7 + $0xb0] sm:$0xff]
    %v148 = vld [vmem:[#allocation7 + $0xb8] sm:$0xff]
    %v149 = vld [vmem:[#allocation7 + $0xc0] sm:$0xff]
    %v150 = vld [vmem:[#allocation7 + $0xc8] sm:$0xff]
    %v151 = vld [vmem:[#allocation7 + $0xd0] sm:$0xff]
    %v152 = vld [vmem:[#allocation7 + $0xd8] sm:$0xff]
    %v153 = vld [vmem:[#allocation7 + $0xe0] sm:$0xff]
    %v154 = vld [vmem:[#allocation7 + $0xe8] sm:$0xff]
    %v155 = vld [vmem:[#allocation7 + $0xf0] sm:$0xff]
    %v156 = vld [vmem:[#allocation7 + $0xf8] sm:$0xff]
    %v157 = vld [vmem:[%s7] sm:$0x1]
    %v158 = vld [vmem:[%s0] sm:$0xff]
    %v159 = vld [vmem:[%s0 + $0x8] sm:$0xff]
    %v160 = vld [vmem:[%s0 + $0x10] sm:$0xff]
    %v161 = vld [vmem:[%s0 + $0x18] sm:$0xff]
    %v162 = vld [vmem:[%s0 + $0x20] sm:$0xff]
    %v163 = vld [vmem:[%s0 + $0x28] sm:$0xff]
    %v164 = vld [vmem:[%s0 + $0x30] sm:$0xff]
    %v165 = vld [vmem:[%s0 + $0x38] sm:$0xff]
    %v166 = vld [vmem:[#allocation3] sm:$0xff]
    %v167 = vld [vmem:[#allocation3 + $0x8] sm:$0xff]
    %v168 = vld [vmem:[#allocation3 + $0x10] sm:$0xff]
    %v169 = vld [vmem:[#allocation3 + $0x18] sm:$0xff]
    %v170 = vld [vmem:[#allocation3 + $0x20] sm:$0xff]
    %v171 = vld [vmem:[#allocation3 + $0x28] sm:$0xff]
    %v172 = vld [vmem:[#allocation3 + $0x30] sm:$0xff]
    %v173 = vld [vmem:[#allocation3 + $0x38] sm:$0xff]
    %v174 = vld [vmem:[#allocation3 + $0x40] sm:$0xff]
    %v175 = vld [vmem:[#allocation3 + $0x48] sm:$0xff]
    %v176 = vld [vmem:[#allocation3 + $0x50] sm:$0xff]
    %v177 = vld [vmem:[#allocation3 + $0x58] sm:$0xff]
    %v178 = vld [vmem:[#allocation3 + $0x60] sm:$0xff]
    %v179 = vld [vmem:[#allocation3 + $0x68] sm:$0xff]
    %v180 = vld [vmem:[#allocation3 + $0x70] sm:$0xff]
    %v181 = vld [vmem:[#allocation3 + $0x78] sm:$0xff]
    %v182 = vld [vmem:[%s3] sm:$0x1]
    %v184 = vperm.slane %v182, 0
    %186 = vmatpush.msra.mxu0 %v181
    %187 = vmatpush.msra.mxu0 %v180
    %188 = vmatpush.msra.mxu0 %v179
    %189 = vmatpush.msra.mxu0 %v178
    %190 = vmatpush.msra.mxu0 %v177
    %191 = vmatpush.msra.mxu0 %v176
    %192 = vmatpush.msra.mxu0 %v175
    %193 = vmatpush.msra.mxu0 %v174
    %194 = vmatpush.msra.mxu0 %v173
    %195 = vmatpush.msra.mxu0 %v172
    %196 = vmatpush.msra.mxu0 %v171
    %197 = vmatpush.msra.mxu0 %v170
    %198 = vmatpush.msra.mxu0 %v169
    %199 = vmatpush.msra.mxu0 %v168
    %200 = vmatpush.msra.mxu0 %v167
    %201 = vmatpush.msra.mxu0 %v166
    %202 = vmatmul.f32.gmra.mxu0 %v158
    %v203 = vpop.f32.mrf.mxu0
    %v204 = vadd.f32 %v184, %v203
    %205 = vmatmul.f32.gmra.mxu0 %v159
    %v206 = vpop.f32.mrf.mxu0
    %v207 = vadd.f32 %v184, %v206
    %208 = vmatmul.f32.gmra.mxu0 %v160
    %v209 = vpop.f32.mrf.mxu0
    %v210 = vadd.f32 %v184, %v209
    %211 = vmatmul.f32.gmra.mxu0 %v161
    %v212 = vpop.f32.mrf.mxu0
    %v213 = vadd.f32 %v184, %v212
    %214 = vmatmul.f32.gmra.mxu0 %v162
    %v215 = vpop.f32.mrf.mxu0
    %v216 = vadd.f32 %v184, %v215
    %217 = vmatmul.f32.gmra.mxu0 %v163
    %v218 = vpop.f32.mrf.mxu0
    %v219 = vadd.f32 %v184, %v218
    %220 = vmatmul.f32.gmra.mxu0 %v164
    %v221 = vpop.f32.mrf.mxu0
    %v222 = vadd.f32 %v184, %v221
    %223 = vmatmul.f32.gmra.mxu0 %v165
    %v224 = vpop.f32.mrf.mxu0
    %v225 = vadd.f32 %v184, %v224
    %226 = vdwg.mxu0
    %227 = vst [vmem:[#allocation2] sm:$0xff] %v204
    %228 = vst [vmem:[#allocation2 + $0x8] sm:$0xff] %v207
    %229 = vst [vmem:[#allocation2 + $0x10] sm:$0xff] %v210
    %230 = vst [vmem:[#allocation2 + $0x18] sm:$0xff] %v213
    %231 = vst [vmem:[#allocation2 + $0x20] sm:$0xff] %v216
    %232 = vst [vmem:[#allocation2 + $0x28] sm:$0xff] %v219
    %233 = vst [vmem:[#allocation2 + $0x30] sm:$0xff] %v222
    %234 = vst [vmem:[#allocation2 + $0x38] sm:$0xff] %v225
    %v235 = vld [vmem:[#allocation2] sm:$0xff]
    %236 = vmatpush.msra.mxu0 %v91
    %237 = vmatpush.msra.mxu0 %v90
    %238 = vmatpush.msra.mxu0 %v89
    %239 = vmatpush.msra.mxu0 %v88
    %240 = vmatpush.msra.mxu0 %v87
    %241 = vmatpush.msra.mxu0 %v86
    %242 = vmatpush.msra.mxu0 %v85
    %243 = vmatpush.msra.mxu0 %v84
    %244 = vmatpush.msra.mxu0 %v83
    %245 = vmatpush.msra.mxu0 %v82
    %246 = vmatpush.msra.mxu0 %v81
    %247 = vmatpush.msra.mxu0 %v80
    %248 = vmatpush.msra.mxu0 %v79
    %249 = vmatpush.msra.mxu0 %v78
    %250 = vmatpush.msra.mxu0 %v77
    %251 = vmatpush.msra.mxu0 %v76
    %252 = vmatmul.f32.gmra.mxu0 0.0
    %v253 = vpop.f32.mrf.mxu0
    %v254 = vadd.f32 0.0, %v253
    %255 = vdwg.mxu0
    %v256 = vadd.f32 %v235, %v254
    %v257 = vtanh.pop %v256
    %v259 = vperm.slane %v124, 0
    %261 = vmatpush.msra.mxu0 %v107
    %262 = vmatpush.msra.mxu0 %v106
    %263 = vmatpush.msra.mxu0 %v105
    %264 = vmatpush.msra.mxu0 %v104
    %265 = vmatpush.msra.mxu0 %v103
    %266 = vmatpush.msra.mxu0 %v102
    %267 = vmatpush.msra.mxu0 %v101
    %268 = vmatpush.msra.mxu0 %v100
    %269 = vmatpush.msra.mxu0 %v99
    %270 = vmatpush.msra.mxu0 %v98
    %271 = vmatpush.msra.mxu0 %v97
    %272 = vmatpush.msra.mxu0 %v96
    %273 = vmatpush.msra.mxu0 %v95
    %274 = vmatpush.msra.mxu0 %v94
    %275 = vmatpush.msra.mxu0 %v93
    %276 = vmatpush.msra.mxu0 %v92
    %277 = vmatmul.f32.gmra.mxu0 %v257
    %v278 = vpop.f32.mrf.mxu0
    %v279 = vadd.f32 %v259, %v278
    %280 = vdwg.mxu0
    %281 = vmatpush.msra.mxu0 %v123
    %282 = vmatpush.msra.mxu0 %v122
    %283 = vmatpush.msra.mxu0 %v121
    %284 = vmatpush.msra.mxu0 %v120
    %285 = vmatpush.msra.mxu0 %v119
    %286 = vmatpush.msra.mxu0 %v118
    %287 = vmatpush.msra.mxu0 %v117
    %288 = vmatpush.msra.mxu0 %v116
    %289 = vmatpush.msra.mxu0 %v115
    %290 = vmatpush.msra.mxu0 %v114
    %291 = vmatpush.msra.mxu0 %v113
    %292 = vmatpush.msra.mxu0 %v112
    %293 = vmatpush.msra.mxu0 %v111
    %294 = vmatpush.msra.mxu0 %v110
    %295 = vmatpush.msra.mxu0 %v109
    %296 = vmatpush.msra.mxu0 %v108
    %297 = vmatmul.f32.gmra.mxu0 0.0
    %v298 = vpop.f32.mrf.mxu0
    %v299 = vadd.f32 %v279, %v298
    %300 = vdwg.mxu0
    %v301 = vtanh.pop %v299
    %v303 = vperm.slane %v157, 0
    %305 = vmatpush.msra.mxu0 %v140
    %306 = vmatpush.msra.mxu0 %v139
    %307 = vmatpush.msra.mxu0 %v138
    %308 = vmatpush.msra.mxu0 %v137
    %309 = vmatpush.msra.mxu0 %v136
    %310 = vmatpush.msra.mxu0 %v135
    %311 = vmatpush.msra.mxu0 %v134
    %312 = vmatpush.msra.mxu0 %v133
    %313 = vmatpush.msra.mxu0 %v132
    %314 = vmatpush.msra.mxu0 %v131
    %315 = vmatpush.msra.mxu0 %v130
    %316 = vmatpush.msra.mxu0 %v129
    %317 = vmatpush.msra.mxu0 %v128
    %318 = vmatpush.msra.mxu0 %v127
    %319 = vmatpush.msra.mxu0 %v126
    %320 = vmatpush.msra.mxu0 %v125
    %321 = vmatmul.f32.gmra.mxu0 %v301
    %v322 = vpop.f32.mrf.mxu0
    %v323 = vadd.f32 %v303, %v322
    %324 = vdwg.mxu0
    %325 = vmatpush.msra.mxu0 %v156
    %326 = vmatpush.msra.mxu0 %v155
    %327 = vmatpush.msra.mxu0 %v154
    %328 = vmatpush.msra.mxu0 %v153
    %329 = vmatpush.msra.mxu0 %v152
    %330 = vmatpush.msra.mxu0 %v151
    %331 = vmatpush.msra.mxu0 %v150
    %332 = vmatpush.msra.mxu0 %v149
    %333 = vmatpush.msra.mxu0 %v148
    %334 = vmatpush.msra.mxu0 %v147
    %335 = vmatpush.msra.mxu0 %v146
    %336 = vmatpush.msra.mxu0 %v145
    %337 = vmatpush.msra.mxu0 %v144
    %338 = vmatpush.msra.mxu0 %v143
    %339 = vmatpush.msra.mxu0 %v142
    %340 = vmatpush.msra.mxu0 %v141
    %341 = vmatmul.f32.gmra.mxu0 0.0
    %v342 = vpop.f32.mrf.mxu0
    %v343 = vadd.f32 %v323, %v342
    %344 = vdwg.mxu0
    %v345 = vtanh.pop %v343
    %346 = vst [vmem:[%s8] sm:$0xff] %v345
    %s347 = scalar_lea.vmem [#allocation2], 8
    %v348 = vld [vmem:[%s347] sm:$0xff]
    %349 = vmatpush.msra.mxu0 %v91
    %350 = vmatpush.msra.mxu0 %v90
    %351 = vmatpush.msra.mxu0 %v89
    %352 = vmatpush.msra.mxu0 %v88
    %353 = vmatpush.msra.mxu0 %v87
    %354 = vmatpush.msra.mxu0 %v86
    %355 = vmatpush.msra.mxu0 %v85
    %356 = vmatpush.msra.mxu0 %v84
    %357 = vmatpush.msra.mxu0 %v83
    %358 = vmatpush.msra.mxu0 %v82
    %359 = vmatpush.msra.mxu0 %v81
    %360 = vmatpush.msra.mxu0 %v80
    %361 = vmatpush.msra.mxu0 %v79
    %362 = vmatpush.msra.mxu0 %v78
    %363 = vmatpush.msra.mxu0 %v77
    %364 = vmatpush.msra.mxu0 %v76
    %365 = vmatmul.f32.gmra.mxu0 %v257
    %v366 = vpop.f32.mrf.mxu0
    %v367 = vadd.f32 0.0, %v366
    %368 = vdwg.mxu0
    %v369 = vadd.f32 %v348, %v367
    %v370 = vtanh.pop %v369
    %371 = vmatpush.msra.mxu0 %v107
    %372 = vmatpush.msra.mxu0 %v106
    %373 = vmatpush.msra.mxu0 %v105
    %374 = vmatpush.msra.mxu0 %v104
    %375 = vmatpush.msra.mxu0 %v103
    %376 = vmatpush.msra.mxu0 %v102
    %377 = vmatpush.msra.mxu0 %v101
    %378 = vmatpush.msra.mxu0 %v100
    %379 = vmatpush.msra.mxu0 %v99
    %380 = vmatpush.msra.mxu0 %v98
    %381 = vmatpush.msra.mxu0 %v97
    %382 = vmatpush.msra.mxu0 %v96
    %383 = vmatpush.msra.mxu0 %v95
    %384 = vmatpush.msra.mxu0 %v94
    %385 = vmatpush.msra.mxu0 %v93
    %386 = vmatpush.msra.mxu0 %v92
    %387 = vmatmul.f32.gmra.mxu0 %v370
    %v388 = vpop.f32.mrf.mxu0
    %v389 = vadd.f32 %v259, %v388
    %390 = vdwg.mxu0
    %391 = vmatpush.msra.mxu0 %v123
    %392 = vmatpush.msra.mxu0 %v122
    %393 = vmatpush.msra.mxu0 %v121
    %394 = vmatpush.msra.mxu0 %v120
    %395 = vmatpush.msra.mxu0 %v119
    %396 = vmatpush.msra.mxu0 %v118
    %397 = vmatpush.msra.mxu0 %v117
    %398 = vmatpush.msra.mxu0 %v116
    %399 = vmatpush.msra.mxu0 %v115
    %400 = vmatpush.msra.mxu0 %v114
    %401 = vmatpush.msra.mxu0 %v113
    %402 = vmatpush.msra.mxu0 %v112
    %403 = vmatpush.msra.mxu0 %v111
    %404 = vmatpush.msra.mxu0 %v110
    %405 = vmatpush.msra.mxu0 %v109
    %406 = vmatpush.msra.mxu0 %v108
    %407 = vmatmul.f32.gmra.mxu0 %v301
    %v408 = vpop.f32.mrf.mxu0
    %v409 = vadd.f32 %v389, %v408
    %410 = vdwg.mxu0
    %v411 = vtanh.pop %v409
    %412 = vmatpush.msra.mxu0 %v140
    %413 = vmatpush.msra.mxu0 %v139
    %414 = vmatpush.msra.mxu0 %v138
    %415 = vmatpush.msra.mxu0 %v137
    %416 = vmatpush.msra.mxu0 %v136
    %417 = vmatpush.msra.mxu0 %v135
    %418 = vmatpush.msra.mxu0 %v134
    %419 = vmatpush.msra.mxu0 %v133
    %420 = vmatpush.msra.mxu0 %v132
    %421 = vmatpush.msra.mxu0 %v131
    %422 = vmatpush.msra.mxu0 %v130
    %423 = vmatpush.msra.mxu0 %v129
    %424 = vmatpush.msra.mxu0 %v128
    %425 = vmatpush.msra.mxu0 %v127
    %426 = vmatpush.msra.mxu0 %v126
    %427 = vmatpush.msra.mxu0 %v125
    %428 = vmatmul.f32.gmra.mxu0 %v411
    %v429 = vpop.f32.mrf.mxu0
    %v430 = vadd.f32 %v303, %v429
    %431 = vdwg.mxu0
    %432 = vmatpush.msra.mxu0 %v156
    %433 = vmatpush.msra.mxu0 %v155
    %434 = vmatpush.msra.mxu0 %v154
    %435 = vmatpush.msra.mxu0 %v153
    %436 = vmatpush.msra.mxu0 %v152
    %437 = vmatpush.msra.mxu0 %v151
    %438 = vmatpush.msra.mxu0 %v150
    %439 = vmatpush.msra.mxu0 %v149
    %440 = vmatpush.msra.mxu0 %v148
    %441 = vmatpush.msra.mxu0 %v147
    %442 = vmatpush.msra.mxu0 %v146
    %443 = vmatpush.msra.mxu0 %v145
    %444 = vmatpush.msra.mxu0 %v144
    %445 = vmatpush.msra.mxu0 %v143
    %446 = vmatpush.msra.mxu0 %v142
    %447 = vmatpush.msra.mxu0 %v141
    %448 = vmatmul.f32.gmra.mxu0 %v345
    %v449 = vpop.f32.mrf.mxu0
    %v450 = vadd.f32 %v430, %v449
    %451 = vdwg.mxu0
    %v452 = vtanh.pop %v450
    %s453 = scalar_lea.vmem %s8, 8
    %454 = vst [vmem:[%s453] sm:$0xff] %v452
    %s455 = scalar_lea.vmem [#allocation2], 16
    %v456 = vld [vmem:[%s455] sm:$0xff]
    %457 = vmatpush.msra.mxu0 %v91
    %458 = vmatpush.msra.mxu0 %v90
    %459 = vmatpush.msra.mxu0 %v89
    %460 = vmatpush.msra.mxu0 %v88
    %461 = vmatpush.msra.mxu0 %v87
    %462 = vmatpush.msra.mxu0 %v86
    %463 = vmatpush.msra.mxu0 %v85
    %464 = vmatpush.msra.mxu0 %v84
    %465 = vmatpush.msra.mxu0 %v83
    %466 = vmatpush.msra.mxu0 %v82
    %467 = vmatpush.msra.mxu0 %v81
    %468 = vmatpush.msra.mxu0 %v80
    %469 = vmatpush.msra.mxu0 %v79
    %470 = vmatpush.msra.mxu0 %v78
    %471 = vmatpush.msra.mxu0 %v77
    %472 = vmatpush.msra.mxu0 %v76
    %473 = vmatmul.f32.gmra.mxu0 %v370
    %v474 = vpop.f32.mrf.mxu0
    %v475 = vadd.f32 0.0, %v474
    %476 = vdwg.mxu0
    %v477 = vadd.f32 %v456, %v475
    %v478 = vtanh.pop %v477
    %479 = vmatpush.msra.mxu0 %v107
    %480 = vmatpush.msra.mxu0 %v106
    %481 = vmatpush.msra.mxu0 %v105
    %482 = vmatpush.msra.mxu0 %v104
    %483 = vmatpush.msra.mxu0 %v103
    %484 = vmatpush.msra.mxu0 %v102
    %485 = vmatpush.msra.mxu0 %v101
    %486 = vmatpush.msra.mxu0 %v100
    %487 = vmatpush.msra.mxu0 %v99
    %488 = vmatpush.msra.mxu0 %v98
    %489 = vmatpush.msra.mxu0 %v97
    %490 = vmatpush.msra.mxu0 %v96
    %491 = vmatpush.msra.mxu0 %v95
    %492 = vmatpush.msra.mxu0 %v94
    %493 = vmatpush.msra.mxu0 %v93
    %494 = vmatpush.msra.mxu0 %v92
    %495 = vmatmul.f32.gmra.mxu0 %v478
    %v496 = vpop.f32.mrf.mxu0
    %v497 = vadd.f32 %v259, %v496
    %498 = vdwg.mxu0
    %499 = vmatpush.msra.mxu0 %v123
    %500 = vmatpush.msra.mxu0 %v122
    %501 = vmatpush.msra.mxu0 %v121
    %502 = vmatpush.msra.mxu0 %v120
    %503 = vmatpush.msra.mxu0 %v119
    %504 = vmatpush.msra.mxu0 %v118
    %505 = vmatpush.msra.mxu0 %v117
    %506 = vmatpush.msra.mxu0 %v116
    %507 = vmatpush.msra.mxu0 %v115
    %508 = vmatpush.msra.mxu0 %v114
    %509 = vmatpush.msra.mxu0 %v113
    %510 = vmatpush.msra.mxu0 %v112
    %511 = vmatpush.msra.mxu0 %v111
    %512 = vmatpush.msra.mxu0 %v110
    %513 = vmatpush.msra.mxu0 %v109
    %514 = vmatpush.msra.mxu0 %v108
    %515 = vmatmul.f32.gmra.mxu0 %v411
    %v516 = vpop.f32.mrf.mxu0
    %v517 = vadd.f32 %v497, %v516
    %518 = vdwg.mxu0
    %v519 = vtanh.pop %v517
    %520 = vmatpush.msra.mxu0 %v140
    %521 = vmatpush.msra.mxu0 %v139
    %522 = vmatpush.msra.mxu0 %v138
    %523 = vmatpush.msra.mxu0 %v137
    %524 = vmatpush.msra.mxu0 %v136
    %525 = vmatpush.msra.mxu0 %v135
    %526 = vmatpush.msra.mxu0 %v134
    %527 = vmatpush.msra.mxu0 %v133
    %528 = vmatpush.msra.mxu0 %v132
    %529 = vmatpush.msra.mxu0 %v131
    %530 = vmatpush.msra.mxu0 %v130
    %531 = vmatpush.msra.mxu0 %v129
    %532 = vmatpush.msra.mxu0 %v128
    %533 = vmatpush.msra.mxu0 %v127
    %534 = vmatpush.msra.mxu0 %v126
    %535 = vmatpush.msra.mxu0 %v125
    %536 = vmatmul.f32.gmra.mxu0 %v519
    %v537 = vpop.f32.mrf.mxu0
    %v538 = vadd.f32 %v303, %v537
    %539 = vdwg.mxu0
    %540 = vmatpush.msra.mxu0 %v156
    %541 = vmatpush.msra.mxu0 %v155
    %542 = vmatpush.msra.mxu0 %v154
    %543 = vmatpush.msra.mxu0 %v153
    %544 = vmatpush.msra.mxu0 %v152
    %545 = vmatpush.msra.mxu0 %v151
    %546 = vmatpush.msra.mxu0 %v150
    %547 = vmatpush.msra.mxu0 %v149
    %548 = vmatpush.msra.mxu0 %v148
    %549 = vmatpush.msra.mxu0 %v147
    %550 = vmatpush.msra.mxu0 %v146
    %551 = vmatpush.msra.mxu0 %v145
    %552 = vmatpush.msra.mxu0 %v144
    %553 = vmatpush.msra.mxu0 %v143
    %554 = vmatpush.msra.mxu0 %v142
    %555 = vmatpush.msra.mxu0 %v141
    %556 = vmatmul.f32.gmra.mxu0 %v452
    %v557 = vpop.f32.mrf.mxu0
    %v558 = vadd.f32 %v538, %v557
    %559 = vdwg.mxu0
    %v560 = vtanh.pop %v558
    %s561 = scalar_lea.vmem %s8, 16
    %562 = vst [vmem:[%s561] sm:$0xff] %v560
    %s563 = scalar_lea.vmem [#allocation2], 24
    %v564 = vld [vmem:[%s563] sm:$0xff]
    %565 = vmatpush.msra.mxu0 %v91
    %566 = vmatpush.msra.mxu0 %v90
    %567 = vmatpush.msra.mxu0 %v89
    %568 = vmatpush.msra.mxu0 %v88
    %569 = vmatpush.msra.mxu0 %v87
    %570 = vmatpush.msra.mxu0 %v86
    %571 = vmatpush.msra.mxu0 %v85
    %572 = vmatpush.msra.mxu0 %v84
    %573 = vmatpush.msra.mxu0 %v83
    %574 = vmatpush.msra.mxu0 %v82
    %575 = vmatpush.msra.mxu0 %v81
    %576 = vmatpush.msra.mxu0 %v80
    %577 = vmatpush.msra.mxu0 %v79
    %578 = vmatpush.msra.mxu0 %v78
    %579 = vmatpush.msra.mxu0 %v77
    %580 = vmatpush.msra.mxu0 %v76
    %581 = vmatmul.f32.gmra.mxu0 %v478
    %v582 = vpop.f32.mrf.mxu0
    %v583 = vadd.f32 0.0, %v582
    %584 = vdwg.mxu0
    %v585 = vadd.f32 %v564, %v583
    %v586 = vtanh.pop %v585
    %587 = vmatpush.msra.mxu0 %v107
    %588 = vmatpush.msra.mxu0 %v106
    %589 = vmatpush.msra.mxu0 %v105
    %590 = vmatpush.msra.mxu0 %v104
    %591 = vmatpush.msra.mxu0 %v103
    %592 = vmatpush.msra.mxu0 %v102
    %593 = vmatpush.msra.mxu0 %v101
    %594 = vmatpush.msra.mxu0 %v100
    %595 = vmatpush.msra.mxu0 %v99
    %596 = vmatpush.msra.mxu0 %v98
    %597 = vmatpush.msra.mxu0 %v97
    %598 = vmatpush.msra.mxu0 %v96
    %599 = vmatpush.msra.mxu0 %v95
    %600 = vmatpush.msra.mxu0 %v94
    %601 = vmatpush.msra.mxu0 %v93
    %602 = vmatpush.msra.mxu0 %v92
    %603 = vmatmul.f32.gmra.mxu0 %v586
    %v604 = vpop.f32.mrf.mxu0
    %v605 = vadd.f32 %v259, %v604
    %606 = vdwg.mxu0
    %607 = vmatpush.msra.mxu0 %v123
    %608 = vmatpush.msra.mxu0 %v122
    %609 = vmatpush.msra.mxu0 %v121
    %610 = vmatpush.msra.mxu0 %v120
    %611 = vmatpush.msra.mxu0 %v119
    %612 = vmatpush.msra.mxu0 %v118
    %613 = vmatpush.msra.mxu0 %v117
    %614 = vmatpush.msra.mxu0 %v116
    %615 = vmatpush.msra.mxu0 %v115
    %616 = vmatpush.msra.mxu0 %v114
    %617 = vmatpush.msra.mxu0 %v113
    %618 = vmatpush.msra.mxu0 %v112
    %619 = vmatpush.msra.mxu0 %v111
    %620 = vmatpush.msra.mxu0 %v110
    %621 = vmatpush.msra.mxu0 %v109
    %622 = vmatpush.msra.mxu0 %v108
    %623 = vmatmul.f32.gmra.mxu0 %v519
    %v624 = vpop.f32.mrf.mxu0
    %v625 = vadd.f32 %v605, %v624
    %626 = vdwg.mxu0
    %v627 = vtanh.pop %v625
    %628 = vmatpush.msra.mxu0 %v140
    %629 = vmatpush.msra.mxu0 %v139
    %630 = vmatpush.msra.mxu0 %v138
    %631 = vmatpush.msra.mxu0 %v137
    %632 = vmatpush.msra.mxu0 %v136
    %633 = vmatpush.msra.mxu0 %v135
    %634 = vmatpush.msra.mxu0 %v134
    %635 = vmatpush.msra.mxu0 %v133
    %636 = vmatpush.msra.mxu0 %v132
    %637 = vmatpush.msra.mxu0 %v131
    %638 = vmatpush.msra.mxu0 %v130
    %639 = vmatpush.msra.mxu0 %v129
    %640 = vmatpush.msra.mxu0 %v128
    %641 = vmatpush.msra.mxu0 %v127
    %642 = vmatpush.msra.mxu0 %v126
    %643 = vmatpush.msra.mxu0 %v125
    %644 = vmatmul.f32.gmra.mxu0 %v627
    %v645 = vpop.f32.mrf.mxu0
    %v646 = vadd.f32 %v303, %v645
    %647 = vdwg.mxu0
    %648 = vmatpush.msra.mxu0 %v156
    %649 = vmatpush.msra.mxu0 %v155
    %650 = vmatpush.msra.mxu0 %v154
    %651 = vmatpush.msra.mxu0 %v153
    %652 = vmatpush.msra.mxu0 %v152
    %653 = vmatpush.msra.mxu0 %v151
    %654 = vmatpush.msra.mxu0 %v150
    %655 = vmatpush.msra.mxu0 %v149
    %656 = vmatpush.msra.mxu0 %v148
    %657 = vmatpush.msra.mxu0 %v147
    %658 = vmatpush.msra.mxu0 %v146
    %659 = vmatpush.msra.mxu0 %v145
    %660 = vmatpush.msra.mxu0 %v144
    %661 = vmatpush.msra.mxu0 %v143
    %662 = vmatpush.msra.mxu0 %v142
    %663 = vmatpush.msra.mxu0 %v141
    %664 = vmatmul.f32.gmra.mxu0 %v560
    %v665 = vpop.f32.mrf.mxu0
    %v666 = vadd.f32 %v646, %v665
    %667 = vdwg.mxu0
    %v668 = vtanh.pop %v666
    %s669 = scalar_lea.vmem %s8, 24
    %670 = vst [vmem:[%s669] sm:$0xff] %v668
    %s671 = scalar_lea.vmem [#allocation2], 32
    %v672 = vld [vmem:[%s671] sm:$0xff]
    %673 = vmatpush.msra.mxu0 %v91
    %674 = vmatpush.msra.mxu0 %v90
    %675 = vmatpush.msra.mxu0 %v89
    %676 = vmatpush.msra.mxu0 %v88
    %677 = vmatpush.msra.mxu0 %v87
    %678 = vmatpush.msra.mxu0 %v86
    %679 = vmatpush.msra.mxu0 %v85
    %680 = vmatpush.msra.mxu0 %v84
    %681 = vmatpush.msra.mxu0 %v83
    %682 = vmatpush.msra.mxu0 %v82
    %683 = vmatpush.msra.mxu0 %v81
    %684 = vmatpush.msra.mxu0 %v80
    %685 = vmatpush.msra.mxu0 %v79
    %686 = vmatpush.msra.mxu0 %v78
    %687 = vmatpush.msra.mxu0 %v77
    %688 = vmatpush.msra.mxu0 %v76
    %689 = vmatmul.f32.gmra.mxu0 %v586
    %v690 = vpop.f32.mrf.mxu0
    %v691 = vadd.f32 0.0, %v690
    %692 = vdwg.mxu0
    %v693 = vadd.f32 %v672, %v691
    %v694 = vtanh.pop %v693
    %695 = vmatpush.msra.mxu0 %v107
    %696 = vmatpush.msra.mxu0 %v106
    %697 = vmatpush.msra.mxu0 %v105
    %698 = vmatpush.msra.mxu0 %v104
    %699 = vmatpush.msra.mxu0 %v103
    %700 = vmatpush.msra.mxu0 %v102
    %701 = vmatpush.msra.mxu0 %v101
    %702 = vmatpush.msra.mxu0 %v100
    %703 = vmatpush.msra.mxu0 %v99
    %704 = vmatpush.msra.mxu0 %v98
    %705 = vmatpush.msra.mxu0 %v97
    %706 = vmatpush.msra.mxu0 %v96
    %707 = vmatpush.msra.mxu0 %v95
    %708 = vmatpush.msra.mxu0 %v94
    %709 = vmatpush.msra.mxu0 %v93
    %710 = vmatpush.msra.mxu0 %v92
    %711 = vmatmul.f32.gmra.mxu0 %v694
    %v712 = vpop.f32.mrf.mxu0
    %v713 = vadd.f32 %v259, %v712
    %714 = vdwg.mxu0
    %715 = vmatpush.msra.mxu0 %v123
    %716 = vmatpush.msra.mxu0 %v122
    %717 = vmatpush.msra.mxu0 %v121
    %718 = vmatpush.msra.mxu0 %v120
    %719 = vmatpush.msra.mxu0 %v119
    %720 = vmatpush.msra.mxu0 %v118
    %721 = vmatpush.msra.mxu0 %v117
    %722 = vmatpush.msra.mxu0 %v116
    %723 = vmatpush.msra.mxu0 %v115
    %724 = vmatpush.msra.mxu0 %v114
    %725 = vmatpush.msra.mxu0 %v113
    %726 = vmatpush.msra.mxu0 %v112
    %727 = vmatpush.msra.mxu0 %v111
    %728 = vmatpush.msra.mxu0 %v110
    %729 = vmatpush.msra.mxu0 %v109
    %730 = vmatpush.msra.mxu0 %v108
    %731 = vmatmul.f32.gmra.mxu0 %v627
    %v732 = vpop.f32.mrf.mxu0
    %v733 = vadd.f32 %v713, %v732
    %734 = vdwg.mxu0
    %v735 = vtanh.pop %v733
    %736 = vmatpush.msra.mxu0 %v140
    %737 = vmatpush.msra.mxu0 %v139
    %738 = vmatpush.msra.mxu0 %v138
    %739 = vmatpush.msra.mxu0 %v137
    %740 = vmatpush.msra.mxu0 %v136
    %741 = vmatpush.msra.mxu0 %v135
    %742 = vmatpush.msra.mxu0 %v134
    %743 = vmatpush.msra.mxu0 %v133
    %744 = vmatpush.msra.mxu0 %v132
    %745 = vmatpush.msra.mxu0 %v131
    %746 = vmatpush.msra.mxu0 %v130
    %747 = vmatpush.msra.mxu0 %v129
    %748 = vmatpush.msra.mxu0 %v128
    %749 = vmatpush.msra.mxu0 %v127
    %750 = vmatpush.msra.mxu0 %v126
    %751 = vmatpush.msra.mxu0 %v125
    %752 = vmatmul.f32.gmra.mxu0 %v735
    %v753 = vpop.f32.mrf.mxu0
    %v754 = vadd.f32 %v303, %v753
    %755 = vdwg.mxu0
    %756 = vmatpush.msra.mxu0 %v156
    %757 = vmatpush.msra.mxu0 %v155
    %758 = vmatpush.msra.mxu0 %v154
    %759 = vmatpush.msra.mxu0 %v153
    %760 = vmatpush.msra.mxu0 %v152
    %761 = vmatpush.msra.mxu0 %v151
    %762 = vmatpush.msra.mxu0 %v150
    %763 = vmatpush.msra.mxu0 %v149
    %764 = vmatpush.msra.mxu0 %v148
    %765 = vmatpush.msra.mxu0 %v147
    %766 = vmatpush.msra.mxu0 %v146
    %767 = vmatpush.msra.mxu0 %v145
    %768 = vmatpush.msra.mxu0 %v144
    %769 = vmatpush.msra.mxu0 %v143
    %770 = vmatpush.msra.mxu0 %v142
    %771 = vmatpush.msra.mxu0 %v141
    %772 = vmatmul.f32.gmra.mxu0 %v668
    %v773 = vpop.f32.mrf.mxu0
    %v774 = vadd.f32 %v754, %v773
    %775 = vdwg.mxu0
    %v776 = vtanh.pop %v774
    %s777 = scalar_lea.vmem %s8, 32
    %778 = vst [vmem:[%s777] sm:$0xff] %v776
    %s779 = scalar_lea.vmem [#allocation2], 40
    %v780 = vld [vmem:[%s779] sm:$0xff]
    %781 = vmatpush.msra.mxu0 %v91
    %782 = vmatpush.msra.mxu0 %v90
    %783 = vmatpush.msra.mxu0 %v89
    %784 = vmatpush.msra.mxu0 %v88
    %785 = vmatpush.msra.mxu0 %v87
    %786 = vmatpush.msra.mxu0 %v86
    %787 = vmatpush.msra.mxu0 %v85
    %788 = vmatpush.msra.mxu0 %v84
    %789 = vmatpush.msra.mxu0 %v83
    %790 = vmatpush.msra.mxu0 %v82
    %791 = vmatpush.msra.mxu0 %v81
    %792 = vmatpush.msra.mxu0 %v80
    %793 = vmatpush.msra.mxu0 %v79
    %794 = vmatpush.msra.mxu0 %v78
    %795 = vmatpush.msra.mxu0 %v77
    %796 = vmatpush.msra.mxu0 %v76
    %797 = vmatmul.f32.gmra.mxu0 %v694
    %v798 = vpop.f32.mrf.mxu0
    %v799 = vadd.f32 0.0, %v798
    %800 = vdwg.mxu0
    %v801 = vadd.f32 %v780, %v799
    %v802 = vtanh.pop %v801
    %803 = vmatpush.msra.mxu0 %v107
    %804 = vmatpush.msra.mxu0 %v106
    %805 = vmatpush.msra.mxu0 %v105
    %806 = vmatpush.msra.mxu0 %v104
    %807 = vmatpush.msra.mxu0 %v103
    %808 = vmatpush.msra.mxu0 %v102
    %809 = vmatpush.msra.mxu0 %v101
    %810 = vmatpush.msra.mxu0 %v100
    %811 = vmatpush.msra.mxu0 %v99
    %812 = vmatpush.msra.mxu0 %v98
    %813 = vmatpush.msra.mxu0 %v97
    %814 = vmatpush.msra.mxu0 %v96
    %815 = vmatpush.msra.mxu0 %v95
    %816 = vmatpush.msra.mxu0 %v94
    %817 = vmatpush.msra.mxu0 %v93
    %818 = vmatpush.msra.mxu0 %v92
    %819 = vmatmul.f32.gmra.mxu0 %v802
    %v820 = vpop.f32.mrf.mxu0
    %v821 = vadd.f32 %v259, %v820
    %822 = vdwg.mxu0
    %823 = vmatpush.msra.mxu0 %v123
    %824 = vmatpush.msra.mxu0 %v122
    %825 = vmatpush.msra.mxu0 %v121
    %826 = vmatpush.msra.mxu0 %v120
    %827 = vmatpush.msra.mxu0 %v119
    %828 = vmatpush.msra.mxu0 %v118
    %829 = vmatpush.msra.mxu0 %v117
    %830 = vmatpush.msra.mxu0 %v116
    %831 = vmatpush.msra.mxu0 %v115
    %832 = vmatpush.msra.mxu0 %v114
    %833 = vmatpush.msra.mxu0 %v113
    %834 = vmatpush.msra.mxu0 %v112
    %835 = vmatpush.msra.mxu0 %v111
    %836 = vmatpush.msra.mxu0 %v110
    %837 = vmatpush.msra.mxu0 %v109
    %838 = vmatpush.msra.mxu0 %v108
    %839 = vmatmul.f32.gmra.mxu0 %v735
    %v840 = vpop.f32.mrf.mxu0
    %v841 = vadd.f32 %v821, %v840
    %842 = vdwg.mxu0
    %v843 = vtanh.pop %v841
    %844 = vmatpush.msra.mxu0 %v140
    %845 = vmatpush.msra.mxu0 %v139
    %846 = vmatpush.msra.mxu0 %v138
    %847 = vmatpush.msra.mxu0 %v137
    %848 = vmatpush.msra.mxu0 %v136
    %849 = vmatpush.msra.mxu0 %v135
    %850 = vmatpush.msra.mxu0 %v134
    %851 = vmatpush.msra.mxu0 %v133
    %852 = vmatpush.msra.mxu0 %v132
    %853 = vmatpush.msra.mxu0 %v131
    %854 = vmatpush.msra.mxu0 %v130
    %855 = vmatpush.msra.mxu0 %v129
    %856 = vmatpush.msra.mxu0 %v128
    %857 = vmatpush.msra.mxu0 %v127
    %858 = vmatpush.msra.mxu0 %v126
    %859 = vmatpush.msra.mxu0 %v125
    %860 = vmatmul.f32.gmra.mxu0 %v843
    %v861 = vpop.f32.mrf.mxu0
    %v862 = vadd.f32 %v303, %v861
    %863 = vdwg.mxu0
    %864 = vmatpush.msra.mxu0 %v156
    %865 = vmatpush.msra.mxu0 %v155
    %866 = vmatpush.msra.mxu0 %v154
    %867 = vmatpush.msra.mxu0 %v153
    %868 = vmatpush.msra.mxu0 %v152
    %869 = vmatpush.msra.mxu0 %v151
    %870 = vmatpush.msra.mxu0 %v150
    %871 = vmatpush.msra.mxu0 %v149
    %872 = vmatpush.msra.mxu0 %v148
    %873 = vmatpush.msra.mxu0 %v147
    %874 = vmatpush.msra.mxu0 %v146
    %875 = vmatpush.msra.mxu0 %v145
    %876 = vmatpush.msra.mxu0 %v144
    %877 = vmatpush.msra.mxu0 %v143
    %878 = vmatpush.msra.mxu0 %v142
    %879 = vmatpush.msra.mxu0 %v141
    %880 = vmatmul.f32.gmra.mxu0 %v776
    %v881 = vpop.f32.mrf.mxu0
    %v882 = vadd.f32 %v862, %v881
    %883 = vdwg.mxu0
    %v884 = vtanh.pop %v882
    %s885 = scalar_lea.vmem %s8, 40
    %886 = vst [vmem:[%s885] sm:$0xff] %v884
    %s887 = scalar_lea.vmem [#allocation2], 48
    %v888 = vld [vmem:[%s887] sm:$0xff]
    %889 = vmatpush.msra.mxu0 %v91
    %890 = vmatpush.msra.mxu0 %v90
    %891 = vmatpush.msra.mxu0 %v89
    %892 = vmatpush.msra.mxu0 %v88
    %893 = vmatpush.msra.mxu0 %v87
    %894 = vmatpush.msra.mxu0 %v86
    %895 = vmatpush.msra.mxu0 %v85
    %896 = vmatpush.msra.mxu0 %v84
    %897 = vmatpush.msra.mxu0 %v83
    %898 = vmatpush.msra.mxu0 %v82
    %899 = vmatpush.msra.mxu0 %v81
    %900 = vmatpush.msra.mxu0 %v80
    %901 = vmatpush.msra.mxu0 %v79
    %902 = vmatpush.msra.mxu0 %v78
    %903 = vmatpush.msra.mxu0 %v77
    %904 = vmatpush.msra.mxu0 %v76
    %905 = vmatmul.f32.gmra.mxu0 %v802
    %v906 = vpop.f32.mrf.mxu0
    %v907 = vadd.f32 0.0, %v906
    %908 = vdwg.mxu0
    %v909 = vadd.f32 %v888, %v907
    %v910 = vtanh.pop %v909
    %911 = vmatpush.msra.mxu0 %v107
    %912 = vmatpush.msra.mxu0 %v106
    %913 = vmatpush.msra.mxu0 %v105
    %914 = vmatpush.msra.mxu0 %v104
    %915 = vmatpush.msra.mxu0 %v103
    %916 = vmatpush.msra.mxu0 %v102
    %917 = vmatpush.msra.mxu0 %v101
    %918 = vmatpush.msra.mxu0 %v100
    %919 = vmatpush.msra.mxu0 %v99
    %920 = vmatpush.msra.mxu0 %v98
    %921 = vmatpush.msra.mxu0 %v97
    %922 = vmatpush.msra.mxu0 %v96
    %923 = vmatpush.msra.mxu0 %v95
    %924 = vmatpush.msra.mxu0 %v94
    %925 = vmatpush.msra.mxu0 %v93
    %926 = vmatpush.msra.mxu0 %v92
    %927 = vmatmul.f32.gmra.mxu0 %v910
    %v928 = vpop.f32.mrf.mxu0
    %v929 = vadd.f32 %v259, %v928
    %930 = vdwg.mxu0
    %931 = vmatpush.msra.mxu0 %v123
    %932 = vmatpush.msra.mxu0 %v122
    %933 = vmatpush.msra.mxu0 %v121
    %934 = vmatpush.msra.mxu0 %v120
    %935 = vmatpush.msra.mxu0 %v119
    %936 = vmatpush.msra.mxu0 %v118
    %937 = vmatpush.msra.mxu0 %v117
    %938 = vmatpush.msra.mxu0 %v116
    %939 = vmatpush.msra.mxu0 %v115
    %940 = vmatpush.msra.mxu0 %v114
    %941 = vmatpush.msra.mxu0 %v113
    %942 = vmatpush.msra.mxu0 %v112
    %943 = vmatpush.msra.mxu0 %v111
    %944 = vmatpush.msra.mxu0 %v110
    %945 = vmatpush.msra.mxu0 %v109
    %946 = vmatpush.msra.mxu0 %v108
    %947 = vmatmul.f32.gmra.mxu0 %v843
    %v948 = vpop.f32.mrf.mxu0
    %v949 = vadd.f32 %v929, %v948
    %950 = vdwg.mxu0
    %v951 = vtanh.pop %v949
    %952 = vmatpush.msra.mxu0 %v140
    %953 = vmatpush.msra.mxu0 %v139
    %954 = vmatpush.msra.mxu0 %v138
    %955 = vmatpush.msra.mxu0 %v137
    %956 = vmatpush.msra.mxu0 %v136
    %957 = vmatpush.msra.mxu0 %v135
    %958 = vmatpush.msra.mxu0 %v134
    %959 = vmatpush.msra.mxu0 %v133
    %960 = vmatpush.msra.mxu0 %v132
    %961 = vmatpush.msra.mxu0 %v131
    %962 = vmatpush.msra.mxu0 %v130
    %963 = vmatpush.msra.mxu0 %v129
    %964 = vmatpush.msra.mxu0 %v128
    %965 = vmatpush.msra.mxu0 %v127
    %966 = vmatpush.msra.mxu0 %v126
    %967 = vmatpush.msra.mxu0 %v125
    %968 = vmatmul.f32.gmra.mxu0 %v951
    %v969 = vpop.f32.mrf.mxu0
    %v970 = vadd.f32 %v303, %v969
    %971 = vdwg.mxu0
    %972 = vmatpush.msra.mxu0 %v156
    %973 = vmatpush.msra.mxu0 %v155
    %974 = vmatpush.msra.mxu0 %v154
    %975 = vmatpush.msra.mxu0 %v153
    %976 = vmatpush.msra.mxu0 %v152
    %977 = vmatpush.msra.mxu0 %v151
    %978 = vmatpush.msra.mxu0 %v150
    %979 = vmatpush.msra.mxu0 %v149
    %980 = vmatpush.msra.mxu0 %v148
    %981 = vmatpush.msra.mxu0 %v147
    %982 = vmatpush.msra.mxu0 %v146
    %983 = vmatpush.msra.mxu0 %v145
    %984 = vmatpush.msra.mxu0 %v144
    %985 = vmatpush.msra.mxu0 %v143
    %986 = vmatpush.msra.mxu0 %v142
    %987 = vmatpush.msra.mxu0 %v141
    %988 = vmatmul.f32.gmra.mxu0 %v884
    %v989 = vpop.f32.mrf.mxu0
    %v990 = vadd.f32 %v970, %v989
    %991 = vdwg.mxu0
    %v992 = vtanh.pop %v990
    %s993 = scalar_lea.vmem %s8, 48
    %994 = vst [vmem:[%s993] sm:$0xff] %v992
    %s995 = scalar_lea.vmem [#allocation2], 56
    %v996 = vld [vmem:[%s995] sm:$0xff]
    %997 = vmatpush.msra.mxu0 %v91
    %998 = vmatpush.msra.mxu0 %v90
    %999 = vmatpush.msra.mxu0 %v89
    %1000 = vmatpush.msra.mxu0 %v88
    %1001 = vmatpush.msra.mxu0 %v87
    %1002 = vmatpush.msra.mxu0 %v86
    %1003 = vmatpush.msra.mxu0 %v85
    %1004 = vmatpush.msra.mxu0 %v84
    %1005 = vmatpush.msra.mxu0 %v83
    %1006 = vmatpush.msra.mxu0 %v82
    %1007 = vmatpush.msra.mxu0 %v81
    %1008 = vmatpush.msra.mxu0 %v80
    %1009 = vmatpush.msra.mxu0 %v79
    %1010 = vmatpush.msra.mxu0 %v78
    %1011 = vmatpush.msra.mxu0 %v77
    %1012 = vmatpush.msra.mxu0 %v76
    %1013 = vmatmul.f32.gmra.mxu0 %v910
    %v1014 = vpop.f32.mrf.mxu0
    %v1015 = vadd.f32 0.0, %v1014
    %1016 = vdwg.mxu0
    %v1017 = vadd.f32 %v996, %v1015
    %v1018 = vtanh.pop %v1017
    %1019 = vmatpush.msra.mxu0 %v107
    %1020 = vmatpush.msra.mxu0 %v106
    %1021 = vmatpush.msra.mxu0 %v105
    %1022 = vmatpush.msra.mxu0 %v104
    %1023 = vmatpush.msra.mxu0 %v103
    %1024 = vmatpush.msra.mxu0 %v102
    %1025 = vmatpush.msra.mxu0 %v101
    %1026 = vmatpush.msra.mxu0 %v100
    %1027 = vmatpush.msra.mxu0 %v99
    %1028 = vmatpush.msra.mxu0 %v98
    %1029 = vmatpush.msra.mxu0 %v97
    %1030 = vmatpush.msra.mxu0 %v96
    %1031 = vmatpush.msra.mxu0 %v95
    %1032 = vmatpush.msra.mxu0 %v94
    %1033 = vmatpush.msra.mxu0 %v93
    %1034 = vmatpush.msra.mxu0 %v92
    %1035 = vmatmul.f32.gmra.mxu0 %v1018
    %v1036 = vpop.f32.mrf.mxu0
    %v1037 = vadd.f32 %v259, %v1036
    %1038 = vdwg.mxu0
    %1039 = vmatpush.msra.mxu0 %v123
    %1040 = vmatpush.msra.mxu0 %v122
    %1041 = vmatpush.msra.mxu0 %v121
    %1042 = vmatpush.msra.mxu0 %v120
    %1043 = vmatpush.msra.mxu0 %v119
    %1044 = vmatpush.msra.mxu0 %v118
    %1045 = vmatpush.msra.mxu0 %v117
    %1046 = vmatpush.msra.mxu0 %v116
    %1047 = vmatpush.msra.mxu0 %v115
    %1048 = vmatpush.msra.mxu0 %v114
    %1049 = vmatpush.msra.mxu0 %v113
    %1050 = vmatpush.msra.mxu0 %v112
    %1051 = vmatpush.msra.mxu0 %v111
    %1052 = vmatpush.msra.mxu0 %v110
    %1053 = vmatpush.msra.mxu0 %v109
    %1054 = vmatpush.msra.mxu0 %v108
    %1055 = vmatmul.f32.gmra.mxu0 %v951
    %v1056 = vpop.f32.mrf.mxu0
    %v1057 = vadd.f32 %v1037, %v1056
    %1058 = vdwg.mxu0
    %v1059 = vtanh.pop %v1057
    %1060 = vmatpush.msra.mxu0 %v140
    %1061 = vmatpush.msra.mxu0 %v139
    %1062 = vmatpush.msra.mxu0 %v138
    %1063 = vmatpush.msra.mxu0 %v137
    %1064 = vmatpush.msra.mxu0 %v136
    %1065 = vmatpush.msra.mxu0 %v135
    %1066 = vmatpush.msra.mxu0 %v134
    %1067 = vmatpush.msra.mxu0 %v133
    %1068 = vmatpush.msra.mxu0 %v132
    %1069 = vmatpush.msra.mxu0 %v131
    %1070 = vmatpush.msra.mxu0 %v130
    %1071 = vmatpush.msra.mxu0 %v129
    %1072 = vmatpush.msra.mxu0 %v128
    %1073 = vmatpush.msra.mxu0 %v127
    %1074 = vmatpush.msra.mxu0 %v126
    %1075 = vmatpush.msra.mxu0 %v125
    %1076 = vmatmul.f32.gmra.mxu0 %v1059
    %v1077 = vpop.f32.mrf.mxu0
    %v1078 = vadd.f32 %v303, %v1077
    %1079 = vdwg.mxu0
    %1080 = vmatpush.msra.mxu0 %v156
    %1081 = vmatpush.msra.mxu0 %v155
    %1082 = vmatpush.msra.mxu0 %v154
    %1083 = vmatpush.msra.mxu0 %v153
    %1084 = vmatpush.msra.mxu0 %v152
    %1085 = vmatpush.msra.mxu0 %v151
    %1086 = vmatpush.msra.mxu0 %v150
    %1087 = vmatpush.msra.mxu0 %v149
    %1088 = vmatpush.msra.mxu0 %v148
    %1089 = vmatpush.msra.mxu0 %v147
    %1090 = vmatpush.msra.mxu0 %v146
    %1091 = vmatpush.msra.mxu0 %v145
    %1092 = vmatpush.msra.mxu0 %v144
    %1093 = vmatpush.msra.mxu0 %v143
    %1094 = vmatpush.msra.mxu0 %v142
    %1095 = vmatpush.msra.mxu0 %v141
    %1096 = vmatmul.f32.gmra.mxu0 %v992
    %v1097 = vpop.f32.mrf.mxu0
    %v1098 = vadd.f32 %v1078, %v1097
    %1099 = vdwg.mxu0
    %v1100 = vtanh.pop %v1098
    %s1101 = scalar_lea.vmem %s8, 56
    %1102 = vst [vmem:[%s1101] sm:$0xff] %v1100
    // Predicated region
    $region46: #{forward.1} parent=1 // pred_check
      _
    $region47: #{forward.1} parent=1 // pred_check_branch
      %1104 = sbr.rel (0) target = $region49
    $region48: #{forward.1} parent=1 // pred_region
      _
    $region49: #{forward.1} parent=1 // pred_fallthru
      _
    // Predicated region
    $region50: #{forward.1} parent=1 // pred_check
      _
    $region51: #{forward.1} parent=1 // pred_check_branch
      %1106 = sbr.rel (0) target = $region53
    $region52: #{forward.1} parent=1 // pred_region
      _
    $region53: #{forward.1} parent=1 // pred_fallthru
      _
    %1107 = vsyncpa [#allocation4], 1
    %1108 = vsyncpa [#allocation6], 1

</llo_original>
